<compile_context>
chip_gen: v7x
topology: tpu7x:2x2x1
jax: 0.10.0
libtpu: 0.0.40
codegen_flags: <defaults>
</compile_context>

<pallas_src>
import functools
import math

import jax
import jax.numpy as jnp
from jax.experimental import pallas as pl
from jax.experimental.pallas import tpu as pltpu


_DTYPE = jnp.bfloat16            # HBM storage dtype for weights & activations
_TM, _TN, _TK = 256, 512, 1024   # tile targets for the large-shape (gridded) path
_LN_EPS = 1e-5


def _compute_vmem_limit():
    try:
        cap = getattr(pltpu.get_tpu_info(), "vmem_capacity_bytes", None)
        if cap:
            # leave ~15% headroom for Mosaic internal scratch (critical on v7x: 64 MiB total)
            return int(cap * 0.85)
    except Exception:
        pass
    return 64 * 1024 * 1024


_VMEM_LIMIT = _compute_vmem_limit()


def _pick_tile(dim, target, align):
    """Largest tile <= target that divides `dim` and is `align`-aligned; else full dim."""
    if dim <= target:
        return dim
    t = (target // align) * align
    while t >= align:
        if dim % t == 0:
            return t
        t -= align
    return dim


def _pick_parallel_tile(dim, target, align):
    """Like _pick_tile but tries to expose >= 2 grid steps (v7x has 2 TensorCores)."""
    t = _pick_tile(dim, target, align)
    if t == dim and dim > 2 * align:
        half = (dim // 2 // align) * align
        while half >= align:
            if dim % half == 0:
                return half
            half -= align
    return t


def _layernorm_f32(y, gamma, beta, eps):
    mean = jnp.mean(y, axis=-1, keepdims=True)
    cent = y - mean
    var = jnp.mean(cent * cent, axis=-1, keepdims=True)
    return cent * jax.lax.rsqrt(var + eps) * gamma + beta


def _mha_from_packed(qkv, num_heads, head_dim, scale):
    """qkv: [S, 3E] bf16 (Q | K | V packed along lanes).  Returns f32 context [S, E]."""
    E = num_heads * head_dim
    ctx = []
    for h in range(num_heads):                       # static unroll over heads
        lo = h * head_dim
        q = qkv[:, lo:lo + head_dim]
        k = qkv[:, E + lo:E + lo + head_dim]
        v = qkv[:, 2 * E + lo:2 * E + lo + head_dim]
        s = jax.lax.dot_general(q, k, (((1,), (1,)), ((), ())),
                                preferred_element_type=jnp.float32) * scale
        m = jnp.max(s, axis=-1, keepdims=True)
        p = jnp.exp(s - m)
        p = p * pl.reciprocal(jnp.sum(p, axis=-1, keepdims=True), approx=True)
        ctx.append(jnp.dot(p.astype(qkv.dtype), v, preferred_element_type=jnp.float32))
    # TODO(synk): for production head_dims use a head-major, 128-lane-aligned QKV layout
    # and per-head output tiles instead of this minor-dim concatenate (XLU relayouts).
    return jnp.concatenate(ctx, axis=-1)


# ----------------------------- matmul (+bias, +relu) -----------------------------

def _mm_bias_kernel(x_ref, w_ref, b_ref, o_ref, acc_ref, *, activation):
    @pl.when(pl.program_id(2) == 0)
    def _():
        acc_ref[...] = jnp.zeros_like(acc_ref)

    acc_ref[...] += jnp.dot(x_ref[...], w_ref[...], preferred_element_type=jnp.float32)

    @pl.when(pl.program_id(2) == pl.num_programs(2) - 1)
    def _():
        y = acc_ref[...] + b_ref[...].astype(jnp.float32)
        if activation == "relu":
            y = jnp.maximum(y, 0.0)
        o_ref[...] = y.astype(o_ref.dtype)


def matmul_bias(x, w, b, activation=None):
    """x: [M, K] @ w: [K, N] + b: [N] (optionally ReLU). bf16 in HBM, f32 accumulation."""
    M, K = x.shape
    K2, N = w.shape
    assert K == K2
    tm = _pick_tile(M, _TM, 16)
    tn = _pick_tile(N, _TN, 128)
    tk = _pick_tile(K, _TK, 128)
    grid = (M // tm, N // tn, K // tk)
    return pl.pallas_call(
        functools.partial(_mm_bias_kernel, activation=activation),
        out_shape=jax.ShapeDtypeStruct((M, N), x.dtype),
        grid_spec=pltpu.PrefetchScalarGridSpec(
            num_scalar_prefetch=0,
            grid=grid,
            in_specs=[
                pl.BlockSpec((tm, tk), lambda i, j, k: (i, k)),
                pl.BlockSpec((tk, tn), lambda i, j, k: (k, j)),
                pl.BlockSpec((1, tn), lambda i, j, k: (0, j)),
            ],
            out_specs=pl.BlockSpec((tm, tn), lambda i, j, k: (i, j)),
            scratch_shapes=[pltpu.VMEM((tm, tn), jnp.float32)]),
        compiler_params=pltpu.CompilerParams(
            dimension_semantics=("parallel", "parallel", "arbitrary"),
            vmem_limit_bytes=_VMEM_LIMIT),
        cost_estimate=pl.CostEstimate(
            flops=2 * M * N * K, transcendentals=0,
            bytes_accessed=2 * (M * K + K * N + M * N + N)),
    )(x, w, b.reshape(1, N))


# -------------------- matmul + bias + residual + LayerNorm --------------------

def _mm_bias_res_ln_kernel(x_ref, w_ref, b_ref, res_ref, g_ref, bb_ref,
                           o_ref, acc_ref, *, eps):
    @pl.when(pl.program_id(1) == 0)
    def _():
        acc_ref[...] = jnp.zeros_like(acc_ref)

    acc_ref[...] += jnp.dot(x_ref[...], w_ref[...], preferred_element_type=jnp.float32)

    @pl.when(pl.program_id(1) == pl.num_programs(1) - 1)
    def _():
        y = acc_ref[...] + b_ref[...].astype(jnp.float32) + res_ref[...].astype(jnp.float32)
        y = _layernorm_f32(y, g_ref[...].astype(jnp.float32),
                           bb_ref[...].astype(jnp.float32), eps)
        o_ref[...] = y.astype(o_ref.dtype)


def matmul_bias_res_ln(x, w, b, res, gamma, beta, eps=_LN_EPS):
    """LayerNorm(res + x @ w + b) fused into the matmul epilogue."""
    M, K = x.shape
    K2, N = w.shape
    assert K == K2 and res.shape == (M, N)
    tm = _pick_parallel_tile(M, _TM, 16)
    tk = _pick_tile(K, _TK, 128)
    grid = (M // tm, K // tk)
    return pl.pallas_call(
        functools.partial(_mm_bias_res_ln_kernel, eps=eps),
        out_shape=jax.ShapeDtypeStruct((M, N), x.dtype),
        grid_spec=pltpu.PrefetchScalarGridSpec(
            num_scalar_prefetch=0,
            grid=grid,
            in_specs=[
                pl.BlockSpec((tm, tk), lambda i, k: (i, k)),
                pl.BlockSpec((tk, N), lambda i, k: (k, 0)),
                pl.BlockSpec((1, N), lambda i, k: (0, 0)),
                pl.BlockSpec((tm, N), lambda i, k: (i, 0)),
                pl.BlockSpec((1, N), lambda i, k: (0, 0)),
                pl.BlockSpec((1, N), lambda i, k: (0, 0)),
            ],
            out_specs=pl.BlockSpec((tm, N), lambda i, k: (i, 0)),
            scratch_shapes=[pltpu.VMEM((tm, N), jnp.float32)]),
        compiler_params=pltpu.CompilerParams(
            dimension_semantics=("parallel", "arbitrary"),
            vmem_limit_bytes=_VMEM_LIMIT),
        cost_estimate=pl.CostEstimate(
            flops=2 * M * N * K, transcendentals=0,
            bytes_accessed=2 * (M * K + K * N + 3 * M * N + 3 * N)),
    )(x, w, b.reshape(1, N), res, gamma.reshape(1, N), beta.reshape(1, N))


# ------- fused MLP (lin1+ReLU+lin2) + LayerNorm + outer residual, F-tiled -------

def _fused_mlp_ln_kernel(x_ref, w1_ref, b1_ref, w2_ref, b2_ref, g_ref, bb_ref,
                         post_ref, o_ref, acc_ref, *, eps):
    @pl.when(pl.program_id(1) == 0)
    def _():
        acc_ref[...] = jnp.zeros_like(acc_ref)

    x = x_ref[...]                                           # [tm, E] bf16 (resident)
    h = jnp.dot(x, w1_ref[...], preferred_element_type=jnp.float32)
    h = jnp.maximum(h + b1_ref[...].astype(jnp.float32), 0.0)
    acc_ref[...] += jnp.dot(h.astype(x.dtype), w2_ref[...],
                            preferred_element_type=jnp.float32)

    @pl.when(pl.program_id(1) == pl.num_programs(1) - 1)
    def _():
        y = acc_ref[...] + b2_ref[...].astype(jnp.float32) + x.astype(jnp.float32)
        y = _layernorm_f32(y, g_ref[...].astype(jnp.float32),
                           bb_ref[...].astype(jnp.float32), eps)
        y = y + post_ref[...].astype(jnp.float32)            # encoder's outer skip
        o_ref[...] = y.astype(o_ref.dtype)


def fused_mlp_ln(x, w1, b1, w2, b2, gamma, beta, post, eps=_LN_EPS):
    """LayerNorm(x + lin2(relu(lin1(x)))) + post; W1/W2 streamed over F-tiles,
    the [tm, tF] intermediate never leaves VMEM."""
    M, E = x.shape
    E1, F = w1.shape
    F2, E2 = w2.shape
    assert E == E1 and F == F2 and E == E2 and post.shape == (M, E)
    tm = _pick_parallel_tile(M, _TM, 16)
    tf = _pick_tile(F, _TK, 128)
    grid = (M // tm, F // tf)
    return pl.pallas_call(
        functools.partial(_fused_mlp_ln_kernel, eps=eps),
        out_shape=jax.ShapeDtypeStruct((M, E), x.dtype),
        grid_spec=pltpu.PrefetchScalarGridSpec(
            num_scalar_prefetch=0,
            grid=grid,
            in_specs=[
                pl.BlockSpec((tm, E), lambda i, f: (i, 0)),
                pl.BlockSpec((E, tf), lambda i, f: (0, f)),
                pl.BlockSpec((1, tf), lambda i, f: (0, f)),
                pl.BlockSpec((tf, E), lambda i, f: (f, 0)),
                pl.BlockSpec((1, E), lambda i, f: (0, 0)),
                pl.BlockSpec((1, E), lambda i, f: (0, 0)),
                pl.BlockSpec((1, E), lambda i, f: (0, 0)),
                pl.BlockSpec((tm, E), lambda i, f: (i, 0)),
            ],
            out_specs=pl.BlockSpec((tm, E), lambda i, f: (i, 0)),
            scratch_shapes=[pltpu.VMEM((tm, E), jnp.float32)]),
        compiler_params=pltpu.CompilerParams(
            dimension_semantics=("parallel", "arbitrary"),
            vmem_limit_bytes=_VMEM_LIMIT),
        cost_estimate=pl.CostEstimate(
            flops=4 * M * E * F, transcendentals=0,
            bytes_accessed=2 * (3 * M * E + 2 * E * F + F + 4 * E)),
    )(x, w1, b1.reshape(1, F), w2, b2.reshape(1, E),
      gamma.reshape(1, E), beta.reshape(1, E), post)


# ----------------------------- attention from packed QKV -----------------------------

def _attn_kernel(qkv_ref, o_ref, *, num_heads, head_dim, scale):
    qkv = qkv_ref[0]                                         # [S, 3E] bf16
    ctx = _mha_from_packed(qkv, num_heads, head_dim, scale)
    o_ref[0] = ctx.astype(o_ref.dtype)                       # single lane-dense store


def attention_from_qkv(qkv, num_heads):
    """qkv: [B, S, 3E] (packed along last dim) -> context [B, S, E]."""
    B, S, threeE = qkv.shape
    E = threeE // 3
    head_dim = E // num_heads
    scale = 1.0 / math.sqrt(head_dim)
    # TODO(synk): for long sequences switch to a flash-style online-softmax kernel
    # tiled over (S/tq, S/tk); the dense [S, S] score matrix is fine at small S.
    return pl.pallas_call(
        functools.partial(_attn_kernel, num_heads=num_heads,
                          head_dim=head_dim, scale=scale),
        out_shape=jax.ShapeDtypeStruct((B, S, E), qkv.dtype),
        grid=(B,),
        in_specs=[pl.BlockSpec((1, S, threeE), lambda b: (b, 0, 0))],
        out_specs=pl.BlockSpec((1, S, E), lambda b: (b, 0, 0)),
        compiler_params=pltpu.CompilerParams(
            dimension_semantics=("parallel",),
            vmem_limit_bytes=_VMEM_LIMIT),
    )(qkv)


# -------------- whole encoder layer in ONE pallas_call (small shapes) --------------

def _fused_layer_kernel(x_ref, wqkv_ref, bqkv_ref, wo_ref, bo_ref, g1_ref, b1n_ref,
                        w1_ref, fb1_ref, w2_ref, fb2_ref, g2_ref, b2n_ref, o_ref,
                        *, num_heads, head_dim, scale, eps):
    x = x_ref[0]                                             # [S, E] bf16
    xf = x.astype(jnp.float32)

    # QKV projection
    qkv = jnp.dot(x, wqkv_ref[...], preferred_element_type=jnp.float32)
    qkv = (qkv + bqkv_ref[...].astype(jnp.float32)).astype(x.dtype)      # [S, 3E]

    # multi-head self-attention
    ctx = _mha_from_packed(qkv, num_heads, head_dim, scale).astype(x.dtype)

    # out-proj + residual + LayerNorm1
    attn = jnp.dot(ctx, wo_ref[...], preferred_element_type=jnp.float32)
    attn = attn + bo_ref[...].astype(jnp.float32)
    y1 = _layernorm_f32(xf + attn, g1_ref[...].astype(jnp.float32),
                        b1n_ref[...].astype(jnp.float32), eps)

    # MLP + residual + LayerNorm2 (hidden [S, F] never leaves VMEM)
    y1b = y1.astype(x.dtype)
    h = jnp.dot(y1b, w1_ref[...], preferred_element_type=jnp.float32)
    h = jnp.maximum(h + fb1_ref[...].astype(jnp.float32), 0.0).astype(x.dtype)
    y2 = jnp.dot(h, w2_ref[...], preferred_element_type=jnp.float32)
    y2 = y2 + fb2_ref[...].astype(jnp.float32) + y1
    y2 = _layernorm_f32(y2, g2_ref[...].astype(jnp.float32),
                        b2n_ref[...].astype(jnp.float32), eps)

    o_ref[0] = (y2 + xf).astype(o_ref.dtype)                 # encoder's outer skip


def fused_encoder_layer(h, lp, num_heads, eps=_LN_EPS):
    B, S, E = h.shape
    head_dim = E // num_heads
    F = lp["lin1_w"].shape[1]

    def full(shape):
        return pl.BlockSpec(shape, lambda *_: (0,) * len(shape))

    return pl.pallas_call(
        functools.partial(_fused_layer_kernel, num_heads=num_heads, head_dim=head_dim,
                          scale=1.0 / math.sqrt(head_dim), eps=eps),
        out_shape=jax.ShapeDtypeStruct((B, S, E), h.dtype),
        grid=(B,),
        in_specs=[
            pl.BlockSpec((1, S, E), lambda b: (b, 0, 0)),
            full((E, 3 * E)), full((1, 3 * E)),
            full((E, E)), full((1, E)), full((1, E)), full((1, E)),
            full((E, F)), full((1, F)),
            full((F, E)), full((1, E)), full((1, E)), full((1, E)),
        ],
        out_specs=pl.BlockSpec((1, S, E), lambda b: (b, 0, 0)),
        compiler_params=pltpu.CompilerParams(
            dimension_semantics=("parallel",),
            vmem_limit_bytes=_VMEM_LIMIT),
        cost_estimate=pl.CostEstimate(
            flops=2 * B * S * (3 * E * E + E * E + 2 * E * F)
                  + 4 * B * num_heads * S * S * head_dim,
            transcendentals=B * num_heads * S * S,
            bytes_accessed=2 * (2 * B * S * E + 3 * E * E + E * E + 2 * E * F)),
    )(h, lp["in_proj_w"], lp["in_proj_b"].reshape(1, -1),
      lp["out_proj_w"], lp["out_proj_b"].reshape(1, -1),
      lp["ln1_w"].reshape(1, -1), lp["ln1_b"].reshape(1, -1),
      lp["lin1_w"], lp["lin1_b"].reshape(1, -1),
      lp["lin2_w"], lp["lin2_b"].reshape(1, -1),
      lp["ln2_w"].reshape(1, -1), lp["ln2_b"].reshape(1, -1))


def _layer_fits_vmem(S, E, F):
    weight_bytes = 2 * (3 * E * E + E * E + 2 * E * F + 3 * E + F + 6 * E)
    act_bytes = 4 * S * (3 * E + 2 * E + F) + 4 * S * E
    return 3 * (weight_bytes + act_bytes) < _VMEM_LIMIT // 2


# ----------------------------- model glue -----------------------------

def extract_patches(x, p):
    """x: [B, C, H, W] -> [B, N, C*p*p]; patch order == Conv2d(stride=p).flatten(2).T."""
    B, C, H, W = x.shape
    hp, wp = H // p, W // p
    x = x.reshape(B, C, hp, p, wp, p)
    x = x.transpose(0, 2, 4, 1, 3, 5)              # [B, hp, wp, C, p, p]
    return x.reshape(B, hp * wp, C * p * p)


def encoder_layer(h, lp, num_heads, fuse):
    """One nn.TransformerEncoderLayer (post-norm, ReLU, dropout=identity) with the
    encoder's outer `+ residual` folded into the final kernel."""
    B, S, E = h.shape
    if fuse:
        return fused_encoder_layer(h, lp, num_heads)
    x_flat = h.reshape(B * S, E)
    qkv = matmul_bias(x_flat, lp["in_proj_w"], lp["in_proj_b"])        # [B*S, 3E]
    ctx = attention_from_qkv(qkv.reshape(B, S, 3 * E), num_heads)      # [B, S, E]
    x1 = matmul_bias_res_ln(ctx.reshape(B * S, E), lp["out_proj_w"],
                            lp["out_proj_b"], x_flat, lp["ln1_w"], lp["ln1_b"])
    out = fused_mlp_ln(x1, lp["lin1_w"], lp["lin1_b"], lp["lin2_w"], lp["lin2_b"],
                       lp["ln2_w"], lp["ln2_b"], post=x_flat)
    return out.reshape(B, S, E)


def vit_encoder_forward(x, params, *, patch_size, num_heads, fuse_layers=True):
    """Mirrors VisionTransformerEncoder.forward (dropout = identity)."""
    B = x.shape[0]
    E = params["proj_w"].shape[1]
    F = params["layers"][0]["lin1_w"].shape[1]

    # patch embedding (Conv2d k=stride=patch == patches @ W + b), bf16 activations
    patches = extract_patches(x, patch_size).astype(_DTYPE)           # [B, N, C*p*p]
    N = patches.shape[1]
    emb = matmul_bias(patches.reshape(B * N, -1), params["proj_w"], params["proj_b"])
    emb = emb.reshape(B, N, E)

    cls = jnp.broadcast_to(params["cls_token"], (B, 1, E))
    h = jnp.concatenate([cls, emb], axis=1) + params["pos_embed"][:, : N + 1]
    # TODO(synk): nn.Dropout(p=0.1) is stochastic at train time; identity here (eval mode).

    S = N + 1
    fuse = fuse_layers and _layer_fits_vmem(S, E, F)
    outputs = []
    for i, lp in enumerate(params["layers"]):
        h = encoder_layer(h, lp, num_heads, fuse)
        if (i + 1) % 3 == 0:
            outputs.append(h.astype(jnp.float32))
    return outputs


# ----------------------------- pure-JAX f32 reference -----------------------------

def _reference_forward(x, params, *, patch_size, num_heads):
    f32 = lambda a: jnp.asarray(a, jnp.float32)

    def ln(v, g, b, eps=_LN_EPS):
        m = jnp.mean(v, -1, keepdims=True)
        c = v - m
        var = jnp.mean(c * c, -1, keepdims=True)
        return c * jax.lax.rsqrt(var + eps) * g + b

    E = params["proj_w"].shape[1]
    patches = extract_patches(x, patch_size)
    B, N, _ = patches.shape
    emb = (patches.reshape(B * N, -1) @ f32(params["proj_w"]) +
           f32(params["proj_b"])).reshape(B, N, E)
    cls = jnp.broadcast_to(f32(params["cls_token"]), (B, 1, E))
    h = jnp.concatenate([cls, emb], axis=1) + f32(params["pos_embed"])[:, : N + 1]
    S = N + 1
    d = E // num_heads
    outs = []
    for i, lp in enumerate(params["layers"]):
        res = h
        hf = h.reshape(B * S, E)
        qkv = (hf @ f32(lp["in_proj_w"]) + f32(lp["in_proj_b"])
               ).reshape(B, S, 3, num_heads, d)
        q = qkv[:, :, 0].transpose(0, 2, 1, 3)
        k = qkv[:, :, 1].transpose(0, 2, 1, 3)
        v = qkv[:, :, 2].transpose(0, 2, 1, 3)
        s = jnp.einsum("bhqd,bhkd->bhqk", q, k) / math.sqrt(d)
        p = jax.nn.softmax(s, axis=-1)
        ctx = jnp.einsum("bhqk,bhkd->bhqd", p, v).transpose(0, 2, 1, 3).reshape(B * S, E)
        attn = ctx @ f32(lp["out_proj_w"]) + f32(lp["out_proj_b"])
        y1 = ln(hf + attn, f32(lp["ln1_w"]), f32(lp["ln1_b"]))
        mlp = jnp.maximum(y1 @ f32(lp["lin1_w"]) + f32(lp["lin1_b"]), 0.0)
        mlp = mlp @ f32(lp["lin2_w"]) + f32(lp["lin2_b"])
        y2 = ln(y1 + mlp, f32(lp["ln2_w"]), f32(lp["ln2_b"]))
        h = y2.reshape(B, S, E) + res
        if (i + 1) % 3 == 0:
            outs.append(h)
    return outs


# ----------------------------- parameter init -----------------------------

def init_params(key, *, img_size, patch_size, in_chans, embed_dim, depth, mlp_dim,
                dtype=_DTYPE):
    num_patches = (img_size // patch_size) ** 2
    ks = jax.random.split(key, 3 + depth)

    def nrm(k, shape):
        return (0.02 * jax.random.normal(k, shape, dtype=jnp.float32)).astype(dtype)

    params = {
        # Conv2d weight [E, C, p, p] flattened -> stored pre-transposed as [C*p*p, E]
        "proj_w": nrm(ks[0], (embed_dim, in_chans, patch_size, patch_size))
                  .reshape(embed_dim, -1).T,
        "proj_b": nrm(ks[1], (embed_dim,)),
        # module __init__ uses zeros for these parameters
        "cls_token": jnp.zeros((1, 1, embed_dim), dtype),
        "pos_embed": jnp.zeros((1, 1 + num_patches, embed_dim), dtype),
        "layers": [],
    }
    for i in range(depth):
        lk = jax.random.split(ks[3 + i], 6)
        params["layers"].append({
            # all weights stored pre-transposed ([K, N]), bf16
            "in_proj_w": nrm(lk[0], (embed_dim, 3 * embed_dim)),
            "in_proj_b": nrm(lk[1], (3 * embed_dim,)),
            "out_proj_w": nrm(lk[2], (embed_dim, embed_dim)),
            "out_proj_b": nrm(lk[3], (embed_dim,)),
            "ln1_w": jnp.ones((embed_dim,), dtype),
            "ln1_b": jnp.zeros((embed_dim,), dtype),
            "lin1_w": nrm(lk[4], (embed_dim, mlp_dim)),
            "lin1_b": jnp.zeros((mlp_dim,), dtype),
            "lin2_w": nrm(lk[5], (mlp_dim, embed_dim)),
            "lin2_b": jnp.zeros((embed_dim,), dtype),
            "ln2_w": jnp.ones((embed_dim,), dtype),
            "ln2_b": jnp.zeros((embed_dim,), dtype),
        })
    return params


# ----------------------------- main -----------------------------

if __name__ == "__main__":
    # small config consistent with the module
    B, C, IMG, PATCH = 2, 4, 16, 4
    EMBED, HEADS, MLP, DEPTH = 32, 4, 64, 3          # 16 patches -> seq len 17

    key = jax.random.PRNGKey(0)
    kx, kp = jax.random.split(key)
    x = jax.random.normal(kx, (B, C, IMG, IMG), dtype=jnp.float32)   # NCHW like PyTorch

    params = init_params(kp, img_size=IMG, patch_size=PATCH, in_chans=C,
                         embed_dim=EMBED, depth=DEPTH, mlp_dim=MLP)

    fwd_fused = jax.jit(functools.partial(vit_encoder_forward, patch_size=PATCH,
                                          num_heads=HEADS, fuse_layers=True))
    fwd_tiled = jax.jit(functools.partial(vit_encoder_forward, patch_size=PATCH,
                                          num_heads=HEADS, fuse_layers=False))
    ref_fn = jax.jit(functools.partial(_reference_forward, patch_size=PATCH,
                                       num_heads=HEADS))

    outs_fused = jax.block_until_ready(fwd_fused(x, params))   # whole-layer fused path
    outs_tiled = jax.block_until_ready(fwd_tiled(x, params))   # gridded large-shape path
    outs_ref = jax.block_until_ready(ref_fn(x, params))

    assert len(outs_fused) == DEPTH // 3 and len(outs_tiled) == DEPTH // 3
    for of, ot, orf in zip(outs_fused, outs_tiled, outs_ref):
        assert of.shape == (B, 1 + (IMG // PATCH) ** 2, EMBED)
        assert bool(jnp.all(jnp.isfinite(of))) and bool(jnp.all(jnp.isfinite(ot)))
        # bf16 storage + approx-reciprocal softmax -> loose tolerance vs f32 reference
        assert float(jnp.max(jnp.abs(of - orf))) < 0.5
        assert float(jnp.max(jnp.abs(ot - orf))) < 0.5

    print("KERNEL_OK")
</pallas_src>

<mosaic_0001>
module attributes {stable_mosaic.version = 11 : i64} {
  func.func @_mm_bias_kernel(%arg0: i32, %arg1: i32, %arg2: i32, %arg3: memref<32x64xbf16, #tpu.memory_space<vmem>>, %arg4: memref<64x32xbf16, #tpu.memory_space<vmem>>, %arg5: memref<1x32xbf16, #tpu.memory_space<vmem>>, %arg6: memref<32x32xbf16, #tpu.memory_space<vmem>>, %arg7: memref<32x32xf32, #tpu.memory_space<vmem>>) attributes {dimension_semantics = [#tpu.dimension_semantics<parallel>, #tpu.dimension_semantics<parallel>, #tpu.dimension_semantics<arbitrary>], iteration_bounds = array<i64: 1, 1, 1>, scalar_prefetch = 0 : i64, scratch_operands = 1 : i64, tpu.core_type = #tpu.core_type<tc>, window_params = [{transform_indices = @transform_0, window_bounds = array<i64: 32, 64>}, {transform_indices = @transform_1, window_bounds = array<i64: 64, 32>}, {transform_indices = @transform_2, window_bounds = array<i64: 1, 32>}, {transform_indices = @transform_3, window_bounds = array<i64: 32, 32>}]} {
    %c0_i32 = arith.constant 0 : i32
    %0 = arith.cmpi eq, %arg2, %c0_i32 : i32
    %1 = arith.extui %0 : i1 to i32
    %c0_i32_0 = arith.constant 0 : i32
    %2 = arith.cmpi ne, %1, %c0_i32_0 : i32
    scf.if %2 {
      %cst_10 = arith.constant 0.000000e+00 : f32
      %12 = vector.broadcast %cst_10 : f32 to vector<32x32xf32>
      %c0_11 = arith.constant 0 : index
      %c0_12 = arith.constant 0 : index
      %13 = vector.load %arg7[%c0_11, %c0_12] : memref<32x32xf32, #tpu.memory_space<vmem>>, vector<32x32xf32>
      tpu.vector_store %arg7[%c0_11, %c0_12], %12 {strides = array<i32>} : memref<32x32xf32, #tpu.memory_space<vmem>>, vector<32x32xf32>,
    } else {
    }
    %c0 = arith.constant 0 : index
    %c0_1 = arith.constant 0 : index
    %3 = vector.load %arg7[%c0, %c0_1] : memref<32x32xf32, #tpu.memory_space<vmem>>, vector<32x32xf32>
    %c0_2 = arith.constant 0 : index
    %c0_3 = arith.constant 0 : index
    %4 = vector.load %arg3[%c0_2, %c0_3] : memref<32x64xbf16, #tpu.memory_space<vmem>>, vector<32x64xbf16>
    %c0_4 = arith.constant 0 : index
    %c0_5 = arith.constant 0 : index
    %5 = vector.load %arg4[%c0_4, %c0_5] : memref<64x32xbf16, #tpu.memory_space<vmem>>, vector<64x32xbf16>
    %cst = arith.constant dense<0.000000e+00> : vector<32x32xf32>
    %6 = tpu.matmul %4, %5, %cst {dimension_numbers = #tpu.dot_dimension_numbers<[1], [0], [0], [1], [0, 0, 1, 1], [], []>} : vector<32x64xbf16>, vector<64x32xbf16>, vector<32x32xf32> -> vector<32x32xf32>
    %7 = arith.addf %3, %6 : vector<32x32xf32>
    %c0_6 = arith.constant 0 : index
    %c0_7 = arith.constant 0 : index
    %8 = vector.load %arg7[%c0_6, %c0_7] : memref<32x32xf32, #tpu.memory_space<vmem>>, vector<32x32xf32>
    tpu.vector_store %arg7[%c0_6, %c0_7], %7 {strides = array<i32>} : memref<32x32xf32, #tpu.memory_space<vmem>>, vector<32x32xf32>,
    %c0_i32_8 = arith.constant 0 : i32
    %9 = arith.cmpi eq, %arg2, %c0_i32_8 : i32
    %10 = arith.extui %9 : i1 to i32
    %c0_i32_9 = arith.constant 0 : i32
    %11 = arith.cmpi ne, %10, %c0_i32_9 : i32
    scf.if %11 {
      %c0_10 = arith.constant 0 : index
      %c0_11 = arith.constant 0 : index
      %12 = vector.load %arg7[%c0_10, %c0_11] : memref<32x32xf32, #tpu.memory_space<vmem>>, vector<32x32xf32>
      %c0_12 = arith.constant 0 : index
      %c0_13 = arith.constant 0 : index
      %13 = vector.load %arg5[%c0_12, %c0_13] : memref<1x32xbf16, #tpu.memory_space<vmem>>, vector<1x32xbf16>
      %14 = arith.extf %13 : vector<1x32xbf16> to vector<1x32xf32>
      %15 = vector.broadcast %14 : vector<1x32xf32> to vector<32x32xf32>
      %16 = arith.addf %12, %15 : vector<32x32xf32>
      %17 = arith.truncf %16 : vector<32x32xf32> to vector<32x32xbf16>
      %c0_14 = arith.constant 0 : index
      %c0_15 = arith.constant 0 : index
      %18 = vector.load %arg6[%c0_14, %c0_15] : memref<32x32xbf16, #tpu.memory_space<vmem>>, vector<32x32xbf16>
      tpu.vector_store %arg6[%c0_14, %c0_15], %17 {strides = array<i32>} : memref<32x32xbf16, #tpu.memory_space<vmem>>, vector<32x32xbf16>,
    } else {
    }
    return
  }
  func.func @transform_0(%arg0: i32, %arg1: i32, %arg2: i32) -> (i32, i32) {
    %c0_i32 = arith.constant 0 : i32
    return %arg0, %arg2 : i32, i32
  }
  func.func @transform_1(%arg0: i32, %arg1: i32, %arg2: i32) -> (i32, i32) {
    %c0_i32 = arith.constant 0 : i32
    return %arg2, %arg1 : i32, i32
  }
  func.func @transform_2(%arg0: i32, %arg1: i32, %arg2: i32) -> (i32, i32) {
    %c0_i32 = arith.constant 0 : i32
    %c0_i32_0 = arith.constant 0 : i32
    return %c0_i32, %arg1 : i32, i32
  }
  func.func @transform_3(%arg0: i32, %arg1: i32, %arg2: i32) -> (i32, i32) {
    %c0_i32 = arith.constant 0 : i32
    return %arg0, %arg1 : i32, i32
  }
}

module attributes {stable_mosaic.version = 11 : i64} {
  func.func @_fused_layer_kernel(%arg0: i32, %arg1: memref<1x17x32xbf16, #tpu.memory_space<vmem>>, %arg2: memref<32x96xbf16, #tpu.memory_space<vmem>>, %arg3: memref<1x96xbf16, #tpu.memory_space<vmem>>, %arg4: memref<32x32xbf16, #tpu.memory_space<vmem>>, %arg5: memref<1x32xbf16, #tpu.memory_space<vmem>>, %arg6: memref<1x32xbf16, #tpu.memory_space<vmem>>, %arg7: memref<1x32xbf16, #tpu.memory_space<vmem>>, %arg8: memref<32x64xbf16, #tpu.memory_space<vmem>>, %arg9: memref<1x64xbf16, #tpu.memory_space<vmem>>, %arg10: memref<64x32xbf16, #tpu.memory_space<vmem>>, %arg11: memref<1x32xbf16, #tpu.memory_space<vmem>>, %arg12: memref<1x32xbf16, #tpu.memory_space<vmem>>, %arg13: memref<1x32xbf16, #tpu.memory_space<vmem>>, %arg14: memref<1x17x32xbf16, #tpu.memory_space<vmem>>) attributes {dimension_semantics = [#tpu.dimension_semantics<parallel>], iteration_bounds = array<i64: 2>, scalar_prefetch = 0 : i64, scratch_operands = 0 : i64, tpu.core_type = #tpu.core_type<tc>, window_params = [{transform_indices = @transform_0, window_bounds = array<i64: 1, 17, 32>}, {pipeline_mode = #tpu.pipeline_mode<synchronous>, transform_indices = @transform_1, window_bounds = array<i64: 32, 96>}, {pipeline_mode = #tpu.pipeline_mode<synchronous>, transform_indices = @transform_2, window_bounds = array<i64: 1, 96>}, {pipeline_mode = #tpu.pipeline_mode<synchronous>, transform_indices = @transform_3, window_bounds = array<i64: 32, 32>}, {pipeline_mode = #tpu.pipeline_mode<synchronous>, transform_indices = @transform_4, window_bounds = array<i64: 1, 32>}, {pipeline_mode = #tpu.pipeline_mode<synchronous>, transform_indices = @transform_5, window_bounds = array<i64: 1, 32>}, {pipeline_mode = #tpu.pipeline_mode<synchronous>, transform_indices = @transform_6, window_bounds = array<i64: 1, 32>}, {pipeline_mode = #tpu.pipeline_mode<synchronous>, transform_indices = @transform_7, window_bounds = array<i64: 32, 64>}, {pipeline_mode = #tpu.pipeline_mode<synchronous>, transform_indices = @transform_8, window_bounds = array<i64: 1, 64>}, {pipeline_mode = #tpu.pipeline_mode<synchronous>, transform_indices = @transform_9, window_bounds = array<i64: 64, 32>}, {pipeline_mode = #tpu.pipeline_mode<synchronous>, transform_indices = @transform_10, window_bounds = array<i64: 1, 32>}, {pipeline_mode = #tpu.pipeline_mode<synchronous>, transform_indices = @transform_11, window_bounds = array<i64: 1, 32>}, {pipeline_mode = #tpu.pipeline_mode<synchronous>, transform_indices = @transform_12, window_bounds = array<i64: 1, 32>}, {transform_indices = @transform_13, window_bounds = array<i64: 1, 17, 32>}]} {
    %c0 = arith.constant 0 : index
    %c0_0 = arith.constant 0 : index
    %c0_1 = arith.constant 0 : index
    %0 = vector.load %arg1[%c0, %c0_0, %c0_1] : memref<1x17x32xbf16, #tpu.memory_space<vmem>>, vector<1x17x32xbf16>
    %1 = vector.shape_cast %0 : vector<1x17x32xbf16> to vector<17x32xbf16>
    %2 = arith.extf %1 : vector<17x32xbf16> to vector<17x32xf32>
    %c0_2 = arith.constant 0 : index
    %c0_3 = arith.constant 0 : index
    %3 = vector.load %arg2[%c0_2, %c0_3] : memref<32x96xbf16, #tpu.memory_space<vmem>>, vector<32x96xbf16>
    %cst = arith.constant dense<0.000000e+00> : vector<17x96xf32>
    %4 = tpu.matmul %1, %3, %cst {dimension_numbers = #tpu.dot_dimension_numbers<[1], [0], [0], [1], [0, 0, 1, 1], [], []>} : vector<17x32xbf16>, vector<32x96xbf16>, vector<17x96xf32> -> vector<17x96xf32>
    %c0_4 = arith.constant 0 : index
    %c0_5 = arith.constant 0 : index
    %5 = vector.load %arg3[%c0_4, %c0_5] : memref<1x96xbf16, #tpu.memory_space<vmem>>, vector<1x96xbf16>
    %6 = arith.extf %5 : vector<1x96xbf16> to vector<1x96xf32>
    %7 = vector.broadcast %6 : vector<1x96xf32> to vector<17x96xf32>
    %8 = arith.addf %4, %7 : vector<17x96xf32>
    %9 = arith.truncf %8 : vector<17x96xf32> to vector<17x96xbf16>
    %10 = vector.extract_strided_slice %9 {offsets = [0, 0], sizes = [17, 8], strides = [1, 1]} : vector<17x96xbf16> to vector<17x8xbf16>
    %11 = vector.extract_strided_slice %9 {offsets = [0, 32], sizes = [17, 8], strides = [1, 1]} : vector<17x96xbf16> to vector<17x8xbf16>
    %12 = vector.extract_strided_slice %9 {offsets = [0, 64], sizes = [17, 8], strides = [1, 1]} : vector<17x96xbf16> to vector<17x8xbf16>
    %cst_6 = arith.constant dense<0.000000e+00> : vector<17x17xf32>
    %13 = tpu.matmul %10, %11, %cst_6 {dimension_numbers = #tpu.dot_dimension_numbers<[1], [1], [0], [0], [0, 0, 1, 0], [], []>} : vector<17x8xbf16>, vector<17x8xbf16>, vector<17x17xf32> -> vector<17x17xf32>
    %cst_7 = arith.constant 0.353553385 : f32
    %14 = vector.broadcast %cst_7 : f32 to vector<17x17xf32>
    %15 = arith.mulf %13, %14 : vector<17x17xf32>
    %cst_8 = arith.constant dense<0xFF800000> : vector<17xf32>
    %16 = vector.multi_reduction <maximumf>, %15, %cst_8 [1] : vector<17x17xf32> to vector<17xf32>
    %17 = vector.shape_cast %16 : vector<17xf32> to vector<17x1xf32>
    %18 = vector.broadcast %17 : vector<17x1xf32> to vector<17x17xf32>
    %19 = arith.subf %15, %18 : vector<17x17xf32>
    %20 = math.exp %19 : vector<17x17xf32>
    %cst_9 = arith.constant dense<0.000000e+00> : vector<17xf32>
    %21 = vector.multi_reduction <add>, %20, %cst_9 [1] : vector<17x17xf32> to vector<17xf32>
    %22 = vector.shape_cast %21 : vector<17xf32> to vector<17x1xf32>
    %23 = tpu.reciprocal %22 {approx = true} : vector<17x1xf32> -> vector<17x1xf32>
    %24 = vector.broadcast %23 : vector<17x1xf32> to vector<17x17xf32>
    %25 = arith.mulf %20, %24 : vector<17x17xf32>
    %26 = arith.truncf %25 : vector<17x17xf32> to vector<17x17xbf16>
    %cst_10 = arith.constant dense<0.000000e+00> : vector<17x8xf32>
    %27 = tpu.matmul %26, %12, %cst_10 {dimension_numbers = #tpu.dot_dimension_numbers<[1], [0], [0], [1], [0, 0, 1, 1], [], []>} : vector<17x17xbf16>, vector<17x8xbf16>, vector<17x8xf32> -> vector<17x8xf32>
    %28 = vector.extract_strided_slice %9 {offsets = [0, 8], sizes = [17, 8], strides = [1, 1]} : vector<17x96xbf16> to vector<17x8xbf16>
    %29 = vector.extract_strided_slice %9 {offsets = [0, 40], sizes = [17, 8], strides = [1, 1]} : vector<17x96xbf16> to vector<17x8xbf16>
    %30 = vector.extract_strided_slice %9 {offsets = [0, 72], sizes = [17, 8], strides = [1, 1]} : vector<17x96xbf16> to vector<17x8xbf16>
    %cst_11 = arith.constant dense<0.000000e+00> : vector<17x17xf32>
    %31 = tpu.matmul %28, %29, %cst_11 {dimension_numbers = #tpu.dot_dimension_numbers<[1], [1], [0], [0], [0, 0, 1, 0], [], []>} : vector<17x8xbf16>, vector<17x8xbf16>, vector<17x17xf32> -> vector<17x17xf32>
    %cst_12 = arith.constant 0.353553385 : f32
    %32 = vector.broadcast %cst_12 : f32 to vector<17x17xf32>
    %33 = arith.mulf %31, %32 : vector<17x17xf32>
    %cst_13 = arith.constant dense<0xFF800000> : vector<17xf32>
    %34 = vector.multi_reduction <maximumf>, %33, %cst_13 [1] : vector<17x17xf32> to vector<17xf32>
    %35 = vector.shape_cast %34 : vector<17xf32> to vector<17x1xf32>
    %36 = vector.broadcast %35 : vector<17x1xf32> to vector<17x17xf32>
    %37 = arith.subf %33, %36 : vector<17x17xf32>
    %38 = math.exp %37 : vector<17x17xf32>
    %cst_14 = arith.constant dense<0.000000e+00> : vector<17xf32>
    %39 = vector.multi_reduction <add>, %38, %cst_14 [1] : vector<17x17xf32> to vector<17xf32>
    %40 = vector.shape_cast %39 : vector<17xf32> to vector<17x1xf32>
    %41 = tpu.reciprocal %40 {approx = true} : vector<17x1xf32> -> vector<17x1xf32>
    %42 = vector.broadcast %41 : vector<17x1xf32> to vector<17x17xf32>
    %43 = arith.mulf %38, %42 : vector<17x17xf32>
    %44 = arith.truncf %43 : vector<17x17xf32> to vector<17x17xbf16>
    %cst_15 = arith.constant dense<0.000000e+00> : vector<17x8xf32>
    %45 = tpu.matmul %44, %30, %cst_15 {dimension_numbers = #tpu.dot_dimension_numbers<[1], [0], [0], [1], [0, 0, 1, 1], [], []>} : vector<17x17xbf16>, vector<17x8xbf16>, vector<17x8xf32> -> vector<17x8xf32>
    %46 = vector.extract_strided_slice %9 {offsets = [0, 16], sizes = [17, 8], strides = [1, 1]} : vector<17x96xbf16> to vector<17x8xbf16>
    %47 = vector.extract_strided_slice %9 {offsets = [0, 48], sizes = [17, 8], strides = [1, 1]} : vector<17x96xbf16> to vector<17x8xbf16>
    %48 = vector.extract_strided_slice %9 {offsets = [0, 80], sizes = [17, 8], strides = [1, 1]} : vector<17x96xbf16> to vector<17x8xbf16>
    %cst_16 = arith.constant dense<0.000000e+00> : vector<17x17xf32>
    %49 = tpu.matmul %46, %47, %cst_16 {dimension_numbers = #tpu.dot_dimension_numbers<[1], [1], [0], [0], [0, 0, 1, 0], [], []>} : vector<17x8xbf16>, vector<17x8xbf16>, vector<17x17xf32> -> vector<17x17xf32>
    %cst_17 = arith.constant 0.353553385 : f32
    %50 = vector.broadcast %cst_17 : f32 to vector<17x17xf32>
    %51 = arith.mulf %49, %50 : vector<17x17xf32>
    %cst_18 = arith.constant dense<0xFF800000> : vector<17xf32>
    %52 = vector.multi_reduction <maximumf>, %51, %cst_18 [1] : vector<17x17xf32> to vector<17xf32>
    %53 = vector.shape_cast %52 : vector<17xf32> to vector<17x1xf32>
    %54 = vector.broadcast %53 : vector<17x1xf32> to vector<17x17xf32>
    %55 = arith.subf %51, %54 : vector<17x17xf32>
    %56 = math.exp %55 : vector<17x17xf32>
    %cst_19 = arith.constant dense<0.000000e+00> : vector<17xf32>
    %57 = vector.multi_reduction <add>, %56, %cst_19 [1] : vector<17x17xf32> to vector<17xf32>
    %58 = vector.shape_cast %57 : vector<17xf32> to vector<17x1xf32>
    %59 = tpu.reciprocal %58 {approx = true} : vector<17x1xf32> -> vector<17x1xf32>
    %60 = vector.broadcast %59 : vector<17x1xf32> to vector<17x17xf32>
    %61 = arith.mulf %56, %60 : vector<17x17xf32>
    %62 = arith.truncf %61 : vector<17x17xf32> to vector<17x17xbf16>
    %cst_20 = arith.constant dense<0.000000e+00> : vector<17x8xf32>
    %63 = tpu.matmul %62, %48, %cst_20 {dimension_numbers = #tpu.dot_dimension_numbers<[1], [0], [0], [1], [0, 0, 1, 1], [], []>} : vector<17x17xbf16>, vector<17x8xbf16>, vector<17x8xf32> -> vector<17x8xf32>
    %64 = vector.extract_strided_slice %9 {offsets = [0, 24], sizes = [17, 8], strides = [1, 1]} : vector<17x96xbf16> to vector<17x8xbf16>
    %65 = vector.extract_strided_slice %9 {offsets = [0, 56], sizes = [17, 8], strides = [1, 1]} : vector<17x96xbf16> to vector<17x8xbf16>
    %66 = vector.extract_strided_slice %9 {offsets = [0, 88], sizes = [17, 8], strides = [1, 1]} : vector<17x96xbf16> to vector<17x8xbf16>
    %cst_21 = arith.constant dense<0.000000e+00> : vector<17x17xf32>
    %67 = tpu.matmul %64, %65, %cst_21 {dimension_numbers = #tpu.dot_dimension_numbers<[1], [1], [0], [0], [0, 0, 1, 0], [], []>} : vector<17x8xbf16>, vector<17x8xbf16>, vector<17x17xf32> -> vector<17x17xf32>
    %cst_22 = arith.constant 0.353553385 : f32
    %68 = vector.broadcast %cst_22 : f32 to vector<17x17xf32>
    %69 = arith.mulf %67, %68 : vector<17x17xf32>
    %cst_23 = arith.constant dense<0xFF800000> : vector<17xf32>
    %70 = vector.multi_reduction <maximumf>, %69, %cst_23 [1] : vector<17x17xf32> to vector<17xf32>
    %71 = vector.shape_cast %70 : vector<17xf32> to vector<17x1xf32>
    %72 = vector.broadcast %71 : vector<17x1xf32> to vector<17x17xf32>
    %73 = arith.subf %69, %72 : vector<17x17xf32>
    %74 = math.exp %73 : vector<17x17xf32>
    %cst_24 = arith.constant dense<0.000000e+00> : vector<17xf32>
    %75 = vector.multi_reduction <add>, %74, %cst_24 [1] : vector<17x17xf32> to vector<17xf32>
    %76 = vector.shape_cast %75 : vector<17xf32> to vector<17x1xf32>
    %77 = tpu.reciprocal %76 {approx = true} : vector<17x1xf32> -> vector<17x1xf32>
    %78 = vector.broadcast %77 : vector<17x1xf32> to vector<17x17xf32>
    %79 = arith.mulf %74, %78 : vector<17x17xf32>
    %80 = arith.truncf %79 : vector<17x17xf32> to vector<17x17xbf16>
    %cst_25 = arith.constant dense<0.000000e+00> : vector<17x8xf32>
    %81 = tpu.matmul %80, %66, %cst_25 {dimension_numbers = #tpu.dot_dimension_numbers<[1], [0], [0], [1], [0, 0, 1, 1], [], []>} : vector<17x17xbf16>, vector<17x8xbf16>, vector<17x8xf32> -> vector<17x8xf32>
    %82 = tpu.concatenate %27, %45, %63, %81 in 1 : vector<17x8xf32>, vector<17x8xf32>, vector<17x8xf32>, vector<17x8xf32> -> vector<17x32xf32>
    %83 = arith.truncf %82 : vector<17x32xf32> to vector<17x32xbf16>
    %c0_26 = arith.constant 0 : index
    %c0_27 = arith.constant 0 : index
    %84 = vector.load %arg4[%c0_26, %c0_27] : memref<32x32xbf16, #tpu.memory_space<vmem>>, vector<32x32xbf16>
    %cst_28 = arith.constant dense<0.000000e+00> : vector<17x32xf32>
    %85 = tpu.matmul %83, %84, %cst_28 {dimension_numbers = #tpu.dot_dimension_numbers<[1], [0], [0], [1], [0, 0, 1, 1], [], []>} : vector<17x32xbf16>, vector<32x32xbf16>, vector<17x32xf32> -> vector<17x32xf32>
    %c0_29 = arith.constant 0 : index
    %c0_30 = arith.constant 0 : index
    %86 = vector.load %arg5[%c0_29, %c0_30] : memref<1x32xbf16, #tpu.memory_space<vmem>>, vector<1x32xbf16>
    %87 = arith.extf %86 : vector<1x32xbf16> to vector<1x32xf32>
    %88 = vector.broadcast %87 : vector<1x32xf32> to vector<17x32xf32>
    %89 = arith.addf %85, %88 : vector<17x32xf32>
    %90 = arith.addf %2, %89 : vector<17x32xf32>
    %c0_31 = arith.constant 0 : index
    %c0_32 = arith.constant 0 : index
    %91 = vector.load %arg6[%c0_31, %c0_32] : memref<1x32xbf16, #tpu.memory_space<vmem>>, vector<1x32xbf16>
    %92 = arith.extf %91 : vector<1x32xbf16> to vector<1x32xf32>
    %c0_33 = arith.constant 0 : index
    %c0_34 = arith.constant 0 : index
    %93 = vector.load %arg7[%c0_33, %c0_34] : memref<1x32xbf16, #tpu.memory_space<vmem>>, vector<1x32xbf16>
    %94 = arith.extf %93 : vector<1x32xbf16> to vector<1x32xf32>
    %cst_35 = arith.constant dense<0.000000e+00> : vector<17xf32>
    %95 = vector.multi_reduction <add>, %90, %cst_35 [1] : vector<17x32xf32> to vector<17xf32>
    %96 = vector.shape_cast %95 : vector<17xf32> to vector<17x1xf32>
    %cst_36 = arith.constant 3.200000e+01 : f32
    %97 = vector.broadcast %cst_36 : f32 to vector<17x1xf32>
    %98 = arith.divf %96, %97 : vector<17x1xf32>
    %99 = vector.broadcast %98 : vector<17x1xf32> to vector<17x32xf32>
    %100 = arith.subf %90, %99 : vector<17x32xf32>
    %101 = arith.mulf %100, %100 : vector<17x32xf32>
    %cst_37 = arith.constant dense<0.000000e+00> : vector<17xf32>
    %102 = vector.multi_reduction <add>, %101, %cst_37 [1] : vector<17x32xf32> to vector<17xf32>
    %103 = vector.shape_cast %102 : vector<17xf32> to vector<17x1xf32>
    %cst_38 = arith.constant 3.200000e+01 : f32
    %104 = vector.broadcast %cst_38 : f32 to vector<17x1xf32>
    %105 = arith.divf %103, %104 : vector<17x1xf32>
    %cst_39 = arith.constant 9.99999974E-6 : f32
    %106 = vector.broadcast %cst_39 : f32 to vector<17x1xf32>
    %107 = arith.addf %105, %106 : vector<17x1xf32>
    %108 = math.rsqrt %107 : vector<17x1xf32>
    %109 = vector.broadcast %108 : vector<17x1xf32> to vector<17x32xf32>
    %110 = arith.mulf %100, %109 : vector<17x32xf32>
    %111 = vector.broadcast %92 : vector<1x32xf32> to vector<17x32xf32>
    %112 = arith.mulf %110, %111 : vector<17x32xf32>
    %113 = vector.broadcast %94 : vector<1x32xf32> to vector<17x32xf32>
    %114 = arith.addf %112, %113 : vector<17x32xf32>
    %115 = arith.truncf %114 : vector<17x32xf32> to vector<17x32xbf16>
    %c0_40 = arith.constant 0 : index
    %c0_41 = arith.constant 0 : index
    %116 = vector.load %arg8[%c0_40, %c0_41] : memref<32x64xbf16, #tpu.memory_space<vmem>>, vector<32x64xbf16>
    %cst_42 = arith.constant dense<0.000000e+00> : vector<17x64xf32>
    %117 = tpu.matmul %115, %116, %cst_42 {dimension_numbers = #tpu.dot_dimension_numbers<[1], [0], [0], [1], [0, 0, 1, 1], [], []>} : vector<17x32xbf16>, vector<32x64xbf16>, vector<17x64xf32> -> vector<17x64xf32>
    %c0_43 = arith.constant 0 : index
    %c0_44 = arith.constant 0 : index
    %118 = vector.load %arg9[%c0_43, %c0_44] : memref<1x64xbf16, #tpu.memory_space<vmem>>, vector<1x64xbf16>
    %119 = arith.extf %118 : vector<1x64xbf16> to vector<1x64xf32>
    %120 = vector.broadcast %119 : vector<1x64xf32> to vector<17x64xf32>
    %121 = arith.addf %117, %120 : vector<17x64xf32>
    %cst_45 = arith.constant 0.000000e+00 : f32
    %122 = vector.broadcast %cst_45 : f32 to vector<17x64xf32>
    %123 = arith.maximumf %121, %122 : vector<17x64xf32>
    %124 = arith.truncf %123 : vector<17x64xf32> to vector<17x64xbf16>
    %c0_46 = arith.constant 0 : index
    %c0_47 = arith.constant 0 : index
    %125 = vector.load %arg10[%c0_46, %c0_47] : memref<64x32xbf16, #tpu.memory_space<vmem>>, vector<64x32xbf16>
    %cst_48 = arith.constant dense<0.000000e+00> : vector<17x32xf32>
    %126 = tpu.matmul %124, %125, %cst_48 {dimension_numbers = #tpu.dot_dimension_numbers<[1], [0], [0], [1], [0, 0, 1, 1], [], []>} : vector<17x64xbf16>, vector<64x32xbf16>, vector<17x32xf32> -> vector<17x32xf32>
    %c0_49 = arith.constant 0 : index
    %c0_50 = arith.constant 0 : index
    %127 = vector.load %arg11[%c0_49, %c0_50] : memref<1x32xbf16, #tpu.memory_space<vmem>>, vector<1x32xbf16>
    %128 = arith.extf %127 : vector<1x32xbf16> to vector<1x32xf32>
    %129 = vector.broadcast %128 : vector<1x32xf32> to vector<17x32xf32>
    %130 = arith.addf %126, %129 : vector<17x32xf32>
    %131 = arith.addf %130, %114 : vector<17x32xf32>
    %c0_51 = arith.constant 0 : index
    %c0_52 = arith.constant 0 : index
    %132 = vector.load %arg12[%c0_51, %c0_52] : memref<1x32xbf16, #tpu.memory_space<vmem>>, vector<1x32xbf16>
    %133 = arith.extf %132 : vector<1x32xbf16> to vector<1x32xf32>
    %c0_53 = arith.constant 0 : index
    %c0_54 = arith.constant 0 : index
    %134 = vector.load %arg13[%c0_53, %c0_54] : memref<1x32xbf16, #tpu.memory_space<vmem>>, vector<1x32xbf16>
    %135 = arith.extf %134 : vector<1x32xbf16> to vector<1x32xf32>
    %cst_55 = arith.constant dense<0.000000e+00> : vector<17xf32>
    %136 = vector.multi_reduction <add>, %131, %cst_55 [1] : vector<17x32xf32> to vector<17xf32>
    %137 = vector.shape_cast %136 : vector<17xf32> to vector<17x1xf32>
    %cst_56 = arith.constant 3.200000e+01 : f32
    %138 = vector.broadcast %cst_56 : f32 to vector<17x1xf32>
    %139 = arith.divf %137, %138 : vector<17x1xf32>
    %140 = vector.broadcast %139 : vector<17x1xf32> to vector<17x32xf32>
    %141 = arith.subf %131, %140 : vector<17x32xf32>
    %142 = arith.mulf %141, %141 : vector<17x32xf32>
    %cst_57 = arith.constant dense<0.000000e+00> : vector<17xf32>
    %143 = vector.multi_reduction <add>, %142, %cst_57 [1] : vector<17x32xf32> to vector<17xf32>
    %144 = vector.shape_cast %143 : vector<17xf32> to vector<17x1xf32>
    %cst_58 = arith.constant 3.200000e+01 : f32
    %145 = vector.broadcast %cst_58 : f32 to vector<17x1xf32>
    %146 = arith.divf %144, %145 : vector<17x1xf32>
    %cst_59 = arith.constant 9.99999974E-6 : f32
    %147 = vector.broadcast %cst_59 : f32 to vector<17x1xf32>
    %148 = arith.addf %146, %147 : vector<17x1xf32>
    %149 = math.rsqrt %148 : vector<17x1xf32>
    %150 = vector.broadcast %149 : vector<17x1xf32> to vector<17x32xf32>
    %151 = arith.mulf %141, %150 : vector<17x32xf32>
    %152 = vector.broadcast %133 : vector<1x32xf32> to vector<17x32xf32>
    %153 = arith.mulf %151, %152 : vector<17x32xf32>
    %154 = vector.broadcast %135 : vector<1x32xf32> to vector<17x32xf32>
    %155 = arith.addf %153, %154 : vector<17x32xf32>
    %156 = arith.addf %155, %2 : vector<17x32xf32>
    %157 = arith.truncf %156 : vector<17x32xf32> to vector<17x32xbf16>
    %c0_60 = arith.constant 0 : index
    %c0_61 = arith.constant 0 : index
    %c0_62 = arith.constant 0 : index
    %158 = vector.load %arg14[%c0_60, %c0_61, %c0_62] : memref<1x17x32xbf16, #tpu.memory_space<vmem>>, vector<1x17x32xbf16>
    %159 = vector.shape_cast %158 : vector<1x17x32xbf16> to vector<17x32xbf16>
    %160 = vector.shape_cast %157 : vector<17x32xbf16> to vector<1x17x32xbf16>
    tpu.vector_store %arg14[%c0_60, %c0_61, %c0_62], %160 {strides = array<i32>} : memref<1x17x32xbf16, #tpu.memory_space<vmem>>, vector<1x17x32xbf16>,
    return
  }
  func.func @transform_0(%arg0: i32) -> (i32, i32, i32) {
    %c0_i32 = arith.constant 0 : i32
    %c0_i32_0 = arith.constant 0 : i32
    %c0_i32_1 = arith.constant 0 : i32
    return %arg0, %c0_i32, %c0_i32_0 : i32, i32, i32
  }
  func.func @transform_1(%arg0: i32) -> (i32, i32) {
    %c0_i32 = arith.constant 0 : i32
    %c0_i32_0 = arith.constant 0 : i32
    %c0_i32_1 = arith.constant 0 : i32
    return %c0_i32, %c0_i32_0 : i32, i32
  }
  func.func @transform_2(%arg0: i32) -> (i32, i32) {
    %c0_i32 = arith.constant 0 : i32
    %c0_i32_0 = arith.constant 0 : i32
    %c0_i32_1 = arith.constant 0 : i32
    return %c0_i32, %c0_i32_0 : i32, i32
  }
  func.func @transform_3(%arg0: i32) -> (i32, i32) {
    %c0_i32 = arith.constant 0 : i32
    %c0_i32_0 = arith.constant 0 : i32
    %c0_i32_1 = arith.constant 0 : i32
    return %c0_i32, %c0_i32_0 : i32, i32
  }
  func.func @transform_4(%arg0: i32) -> (i32, i32) {
    %c0_i32 = arith.constant 0 : i32
    %c0_i32_0 = arith.constant 0 : i32
    %c0_i32_1 = arith.constant 0 : i32
    return %c0_i32, %c0_i32_0 : i32, i32
  }
  func.func @transform_5(%arg0: i32) -> (i32, i32) {
    %c0_i32 = arith.constant 0 : i32
    %c0_i32_0 = arith.constant 0 : i32
    %c0_i32_1 = arith.constant 0 : i32
    return %c0_i32, %c0_i32_0 : i32, i32
  }
  func.func @transform_6(%arg0: i32) -> (i32, i32) {
    %c0_i32 = arith.constant 0 : i32
    %c0_i32_0 = arith.constant 0 : i32
    %c0_i32_1 = arith.constant 0 : i32
    return %c0_i32, %c0_i32_0 : i32, i32
  }
  func.func @transform_7(%arg0: i32) -> (i32, i32) {
    %c0_i32 = arith.constant 0 : i32
    %c0_i32_0 = arith.constant 0 : i32
    %c0_i32_1 = arith.constant 0 : i32
    return %c0_i32, %c0_i32_0 : i32, i32
  }
  func.func @transform_8(%arg0: i32) -> (i32, i32) {
    %c0_i32 = arith.constant 0 : i32
    %c0_i32_0 = arith.constant 0 : i32
    %c0_i32_1 = arith.constant 0 : i32
    return %c0_i32, %c0_i32_0 : i32, i32
  }
  func.func @transform_9(%arg0: i32) -> (i32, i32) {
    %c0_i32 = arith.constant 0 : i32
    %c0_i32_0 = arith.constant 0 : i32
    %c0_i32_1 = arith.constant 0 : i32
    return %c0_i32, %c0_i32_0 : i32, i32
  }
  func.func @transform_10(%arg0: i32) -> (i32, i32) {
    %c0_i32 = arith.constant 0 : i32
    %c0_i32_0 = arith.constant 0 : i32
    %c0_i32_1 = arith.constant 0 : i32
    return %c0_i32, %c0_i32_0 : i32, i32
  }
  func.func @transform_11(%arg0: i32) -> (i32, i32) {
    %c0_i32 = arith.constant 0 : i32
    %c0_i32_0 = arith.constant 0 : i32
    %c0_i32_1 = arith.constant 0 : i32
    return %c0_i32, %c0_i32_0 : i32, i32
  }
  func.func @transform_12(%arg0: i32) -> (i32, i32) {
    %c0_i32 = arith.constant 0 : i32
    %c0_i32_0 = arith.constant 0 : i32
    %c0_i32_1 = arith.constant 0 : i32
    return %c0_i32, %c0_i32_0 : i32, i32
  }
  func.func @transform_13(%arg0: i32) -> (i32, i32, i32) {
    %c0_i32 = arith.constant 0 : i32
    %c0_i32_0 = arith.constant 0 : i32
    %c0_i32_1 = arith.constant 0 : i32
    return %arg0, %c0_i32, %c0_i32_0 : i32, i32, i32
  }
}

</mosaic_0001>

<llo_original>
// kernel: vit_encoder_forward.4
$region0: #{vit_encoder_forward.4}
  #allocation0 [shape = 'u32[]', space=smem, size = 0x4, offset = 0x4, fixed_abs, tag = 'smem constant byte address 0x4 - core index']
  #allocation1 [shape = 'u32[144,128]{1,0:T(1,128)}', space=vmem, size = 0x12000, scoped, tag = 'internal scratch']
  #allocation2 [shape = 'f32[32,32]{1,0:T(8,128)}', space=vmem, size = 0x4000, scoped, tag = 'scratch operand']
  %s0 = inlined_call_operand.hbm [shape: bf16[32,64], index: 0, kind: input, shape index: {}]
  %s1 = inlined_call_operand.hbm [shape: bf16[64,32], index: 1, kind: input, shape index: {}]
  %s2 = inlined_call_operand.hbm [shape: bf16[1,32], index: 2, kind: input, shape index: {}]
  %s3 = inlined_call_operand.hbm [shape: bf16[32,32], index: 3, kind: output, shape index: {}]
  %s4 = sld [smem:[#allocation0]]
  $region42: #{vit_encoder_forward.4} parent=0
    _
  %s6 = ssub.s32 1, %s4
  %s7 = scalar_select 0, %s6, %s4
  $region1: #{vit_encoder_forward.4} parent=0
    #allocation3 [shape = 'u8[8192]{0}', space=vmem, size = 0x2000, scoped, tag = 'input window, operand 0, single buffered']
    #allocation4 [shape = 's32[1]{0}', space=sflag, size = 0x4, scoped, tag = 'scoped memory for vit_encoder_forward.4']
    #allocation5 [shape = 's32[1]{0}', space=sflag, size = 0x4, scoped, tag = 'scoped memory for vit_encoder_forward.4']
    #allocation6 [shape = 'u8[16384]{0}', space=vmem, size = 0x4000, scoped, tag = 'input window, operand 1, single buffered']
    #allocation7 [shape = 's32[1]{0}', space=sflag, size = 0x4, scoped, tag = 'scoped memory for vit_encoder_forward.4']
    #allocation8 [shape = 'u8[512]{0}', space=vmem, size = 0x400, scoped, tag = 'input window, operand 2, single buffered']
    #allocation9 [shape = 'u8[8192]{0}', space=vmem, size = 0x2000, scoped, tag = 'output window, operand 0, single buffered']
    %8 = vsyncpa [#allocation4], 0
    %9 = vsyncpa [#allocation7], 0
    %10 = vsyncpa [#allocation5], 0
    // Predicated region
    $region2: #{vit_encoder_forward.4} parent=1 // pred_check
      _
    $region3: #{vit_encoder_forward.4} parent=1 // pred_check_branch
      %12 = sbr.rel (0) target = $region5
    $region4: #{vit_encoder_forward.4} parent=1 // pred_region
      %s14 = ssub.s32 256, 256
      %15 = vsyncadd [#allocation4], %s14
      %s16 = sshll.u32 [#allocation3], 4
      %s17 = int_to_ptr.vmem [resolvable:$true] %s16
      %22 = dma.hbm_to_vmem [thread:$0]  %s0, 256, %s17, [#allocation4], 64, 64, 4
    $region5: #{vit_encoder_forward.4} parent=1 // pred_fallthru
      _
    // Predicated region
    $region6: #{vit_encoder_forward.4} parent=1 // pred_check
      _
    $region7: #{vit_encoder_forward.4} parent=1 // pred_check_branch
      %24 = sbr.rel (0) target = $region9
    $region8: #{vit_encoder_forward.4} parent=1 // pred_region
      %s26 = ssub.s32 512, 512
      %27 = vsyncadd [#allocation7], %s26
      %s28 = sshll.u32 [#allocation6], 4
      %s29 = int_to_ptr.vmem [resolvable:$true] %s28
      %34 = dma.hbm_to_vmem [thread:$0]  %s1, 512, %s29, [#allocation7], 64, 64, 4
    $region9: #{vit_encoder_forward.4} parent=1 // pred_fallthru
      _
    // Predicated region
    $region10: #{vit_encoder_forward.4} parent=1 // pred_check
      _
    $region11: #{vit_encoder_forward.4} parent=1 // pred_check_branch
      %36 = sbr.rel (0) target = $region13
    $region12: #{vit_encoder_forward.4} parent=1 // pred_region
      %s38 = ssub.s32 16, 16
      %39 = vsyncadd [#allocation7], %s38
      %s41 = sshll.u32 [#allocation8], 4
      %s42 = int_to_ptr.vmem [resolvable:$true] %s41
      %44 = dma.hbm_to_vmem [thread:$0]  %s2, 16, %s42, [#allocation7]
    $region13: #{vit_encoder_forward.4} parent=1 // pred_fallthru
      _
    // Predicated region
    $region14: #{vit_encoder_forward.4} parent=1 // pred_check
      _
    $region15: #{vit_encoder_forward.4} parent=1 // pred_check_branch
      %46 = sbr.rel (0) target = $region17
    $region16: #{vit_encoder_forward.4} parent=1 // pred_region
      %47 = dma.done [#allocation4], 256
    $region17: #{vit_encoder_forward.4} parent=1 // pred_fallthru
      _
    // Predicated region
    $region18: #{vit_encoder_forward.4} parent=1 // pred_check
      _
    $region19: #{vit_encoder_forward.4} parent=1 // pred_check_branch
      %49 = sbr.rel (0) target = $region21
    $region20: #{vit_encoder_forward.4} parent=1 // pred_region
      %50 = dma.done [#allocation7], 512
    $region21: #{vit_encoder_forward.4} parent=1 // pred_fallthru
      _
    // Predicated region
    $region22: #{vit_encoder_forward.4} parent=1 // pred_check
      _
    $region23: #{vit_encoder_forward.4} parent=1 // pred_check_branch
      %52 = sbr.rel (0) target = $region25
    $region24: #{vit_encoder_forward.4} parent=1 // pred_region
      %53 = dma.done [#allocation7], 16
    $region25: #{vit_encoder_forward.4} parent=1 // pred_fallthru
      _
    %p55 = scmp.eq.s32.totalorder 0, 0
    // Predicated region
    $region26: #{vit_encoder_forward.4} parent=1 // pred_check
      %p56 = pneg %p55
    $region27: #{vit_encoder_forward.4} parent=1 // pred_check_branch
      %58 = sbr.rel (%p56) target = $region29
    $region28: #{vit_encoder_forward.4} parent=1 // pred_region
      %vm59 = vcmask 261120
      %60 = vst.msk [vmem:[#allocation2] sm:$0xff] %vm59, 0.0
      %61 = vst.msk [vmem:[#allocation2 + $0x8] sm:$0xff] %vm59, 0.0
      %62 = vst.msk [vmem:[#allocation2 + $0x10] sm:$0xff] %vm59, 0.0
      %63 = vst.msk [vmem:[#allocation2 + $0x18] sm:$0xff] %vm59, 0.0
    $region29: #{vit_encoder_forward.4} parent=1 // pred_fallthru
      _
    %v64 = vld [vmem:[#allocation2] sm:$0xff]
    %v65 = vld [vmem:[#allocation2 + $0x8] sm:$0xff]
    %v66 = vld [vmem:[#allocation2 + $0x10] sm:$0xff]
    %v67 = vld [vmem:[#allocation2 + $0x18] sm:$0xff]
    %v68 = vld [vmem:[#allocation3] sm:$0xf]
    %v69 = vld [vmem:[#allocation3 + $0x4] sm:$0xf]
    %v70 = vld [vmem:[#allocation3 + $0x8] sm:$0xf]
    %v71 = vld [vmem:[#allocation3 + $0xc] sm:$0xf]
    %v72 = vld [vmem:[#allocation6] sm:$0xf]
    %v73 = vld [vmem:[#allocation6 + $0x4] sm:$0xf]
    %v74 = vld [vmem:[#allocation6 + $0x8] sm:$0xf]
    %v75 = vld [vmem:[#allocation6 + $0xc] sm:$0xf]
    %v76 = vld [vmem:[#allocation6 + $0x10] sm:$0xf]
    %v77 = vld [vmem:[#allocation6 + $0x14] sm:$0xf]
    %v78 = vld [vmem:[#allocation6 + $0x18] sm:$0xf]
    %v79 = vld [vmem:[#allocation6 + $0x1c] sm:$0xf]
    %v84 = vunpack.c.l.b16 %v68
    %v85 = vunpack.c.l.b16 %v69
    %v86 = vunpack.c.l.b16 %v70
    %v87 = vunpack.c.l.b16 %v71
    %v88 = vpack.c.b16 %v85, %v84
    %v89 = vpack.c.b16 %v87, %v86
    %v98 = vunpack.c.l.b16 %v72
    %v99 = vunpack.c.l.b16 %v73
    %v100 = vunpack.c.l.b16 %v74
    %v101 = vunpack.c.l.b16 %v75
    %v102 = vunpack.c.l.b16 %v76
    %v103 = vunpack.c.l.b16 %v77
    %v104 = vunpack.c.l.b16 %v78
    %v105 = vunpack.c.l.b16 %v79
    %v106 = vpack.c.b16 %v99, %v98
    %v107 = vpack.c.b16 %v101, %v100
    %v108 = vpack.c.b16 %v103, %v102
    %v109 = vpack.c.b16 %v105, %v104
    %vm114 = vcmask 523264
    %v116 = vsel %vm114, %v88, 0
    %v119 = vsel %vm114, %v89, 0
    %121 = vmatprep.subr.bf16.mxu0 0
    %122 = vmatpush1.bf16.msra.mxu0 %v106
    %123 = vmatprep.subr.bf16.mxu0 0
    %124 = vmatpush1.bf16.msra.mxu0 %v107
    %125 = vmatprep.subr.bf16.mxu0 0
    %126 = vmatpush1.bf16.msra.mxu0 %v108
    %127 = vmatprep.subr.bf16.mxu0 0
    %128 = vmatpush1.bf16.msra.mxu0 %v109
    %129 = vmatprep.subr.bf16.mxu0 0
    %130 = vmatpush1.bf16.msra.mxu0 0
    %131 = vmatprep.subr.bf16.mxu0 0
    %132 = vmatpush1.bf16.msra.mxu0 0
    %133 = vmatprep.subr.bf16.mxu0 0
    %134 = vmatpush1.bf16.msra.mxu0 0
    %135 = vmatprep.subr.bf16.mxu0 0
    %136 = vmatpush1.bf16.msra.mxu0 0
    %137 = vmatprep.subr.bf16.mxu0 0
    %138 = vmatpush1.bf16.msra.mxu0 0
    %139 = vmatprep.subr.bf16.mxu0 0
    %140 = vmatpush1.bf16.msra.mxu0 0
    %141 = vmatprep.subr.bf16.mxu0 0
    %142 = vmatpush1.bf16.msra.mxu0 0
    %143 = vmatprep.subr.bf16.mxu0 0
    %144 = vmatpush1.bf16.msra.mxu0 0
    %145 = vmatprep.subr.bf16.mxu0 0
    %146 = vmatpush1.bf16.msra.mxu0 0
    %147 = vmatprep.subr.bf16.mxu0 0
    %148 = vmatpush1.bf16.msra.mxu0 0
    %149 = vmatprep.subr.bf16.mxu0 0
    %150 = vmatpush1.bf16.msra.mxu0 0
    %151 = vmatprep.subr.bf16.mxu0 0
    %152 = vmatpush1.bf16.msra.mxu0 0
    %153 = vmatprep.mubr.bf16.mxu0 0
    %154 = vmatmul.mubr.bf16.gmra.mrb[0].mxu0 %v116
    %v155 = vpop.f32.mrb[0].mxu0
    %v156 = vadd.f32 0.0, %v155
    %v157 = vpop.f32.mrb[0].mxu0
    %v158 = vpop.f32.mrb[0].mxu0
    %v159 = vadd.f32 0.0, %v158
    %v160 = vpop.f32.mrb[0].mxu0
    %161 = vmatprep.mubr.bf16.mxu0 0
    %162 = vmatmul.mubr.bf16.gmra.mrb[0].mxu0 %v119
    %v163 = vpop.f32.mrb[0].mxu0
    %v164 = vadd.f32 0.0, %v163
    %v165 = vpop.f32.mrb[0].mxu0
    %v166 = vpop.f32.mrb[0].mxu0
    %v167 = vadd.f32 0.0, %v166
    %v168 = vpop.f32.mrb[0].mxu0
    %169 = vdwg.mxu0
    %v170 = vadd.f32 %v64, %v156
    %v171 = vadd.f32 %v65, %v159
    %v172 = vadd.f32 %v66, %v164
    %v173 = vadd.f32 %v67, %v167
    %vm174 = vcmask 261120
    %175 = vst.msk [vmem:[#allocation2] sm:$0xff] %vm174, %v170
    %176 = vst.msk [vmem:[#allocation2 + $0x8] sm:$0xff] %vm174, %v171
    %177 = vst.msk [vmem:[#allocation2 + $0x10] sm:$0xff] %vm174, %v172
    %178 = vst.msk [vmem:[#allocation2 + $0x18] sm:$0xff] %vm174, %v173
    // Predicated region
    $region30: #{vit_encoder_forward.4} parent=1 // pred_check
      %p179 = pneg %p55
    $region31: #{vit_encoder_forward.4} parent=1 // pred_check_branch
      %181 = sbr.rel (%p179) target = $region33
    $region32: #{vit_encoder_forward.4} parent=1 // pred_region
      %v182 = vld [vmem:[#allocation2] sm:$0xff]
      %v183 = vld [vmem:[#allocation2 + $0x8] sm:$0xff]
      %v184 = vld [vmem:[#allocation2 + $0x10] sm:$0xff]
      %v185 = vld [vmem:[#allocation2 + $0x18] sm:$0xff]
      %v186 = vld [vmem:[#allocation8] sm:$0x1]
      %v187 = vunpack.c.l.bf16 %v186
      %v188 = vlaneseq
      %v189 = vshrl.u32 %v188, 7
      %v190 = vsub.s32 0, %v189
      %v191 = vrot.slane %v187, %v190
      %v192 = vadd.f32 %v182, %v191
      %v193 = vadd.f32 %v183, %v191
      %v194 = vadd.f32 %v184, %v191
      %v195 = vadd.f32 %v185, %v191
      %v196 = vpack.c.bf16 %v193, %v192
      %v197 = vpack.c.bf16 %v195, %v194
      %v200 = vunpack.c.l.b16 %v196
      %v201 = vunpack.c.h.b16 %v196
      %v202 = vunpack.c.l.b16 %v197
      %v203 = vunpack.c.h.b16 %v197
      %v204 = vpack.c.b16 %v200, %v200
      %v205 = vpack.c.b16 %v201, %v201
      %v206 = vpack.c.b16 %v202, %v202
      %v207 = vpack.c.b16 %v203, %v203
      %vm212 = vcmask 257024
      %213 = vst.msk [vmem:[#allocation9] sm:$0xf] %vm212, %v204
      %214 = vst.msk [vmem:[#allocation9 + $0x4] sm:$0xf] %vm212, %v205
      %215 = vst.msk [vmem:[#allocation9 + $0x8] sm:$0xf] %vm212, %v206
      %216 = vst.msk [vmem:[#allocation9 + $0xc] sm:$0xf] %vm212, %v207
    $region33: #{vit_encoder_forward.4} parent=1 // pred_fallthru
      _
    // Predicated region
    $region34: #{vit_encoder_forward.4} parent=1 // pred_check
      _
    $region35: #{vit_encoder_forward.4} parent=1 // pred_check_branch
      %218 = sbr.rel (0) target = $region37
    $region36: #{vit_encoder_forward.4} parent=1 // pred_region
      %s220 = ssub.s32 256, 256
      %221 = vsyncadd [#allocation5], %s220
      %s222 = sshll.u32 [#allocation9], 4
      %s223 = int_to_ptr.vmem [resolvable:$true] %s222
      %228 = dma.vmem_to_hbm [thread:$0]  %s223, 256, %s3, [#allocation5], 64, 64, 4
    $region37: #{vit_encoder_forward.4} parent=1 // pred_fallthru
      _
    // Predicated region
    $region38: #{vit_encoder_forward.4} parent=1 // pred_check
      _
    $region39: #{vit_encoder_forward.4} parent=1 // pred_check_branch
      %230 = sbr.rel (0) target = $region41
    $region40: #{vit_encoder_forward.4} parent=1 // pred_region
      %231 = dma.done [#allocation5], 256
    $region41: #{vit_encoder_forward.4} parent=1 // pred_fallthru
      _
    %232 = vsyncpa [#allocation4], 1
    %233 = vsyncpa [#allocation7], 1
    %234 = vsyncpa [#allocation5], 1

// kernel: vit_encoder_forward.5
$region0: #{vit_encoder_forward.5}
  #allocation0 [shape = 'u32[]', space=smem, size = 0x4, offset = 0x4, fixed_abs, tag = 'smem constant byte address 0x4 - core index']
  #allocation1 [shape = 'u32[144,128]{1,0:T(1,128)}', space=vmem, size = 0x12000, scoped, tag = 'internal scratch']
  %s0 = inlined_call_operand.hbm [shape: bf16[2,17,32], index: 0, kind: input, shape index: {}]
  %s1 = inlined_call_operand.hbm [shape: bf16[32,96], index: 1, kind: input, shape index: {}]
  %s2 = inlined_call_operand.hbm [shape: bf16[1,96], index: 2, kind: input, shape index: {}]
  %s3 = inlined_call_operand.hbm [shape: bf16[32,32], index: 3, kind: input, shape index: {}]
  %s4 = inlined_call_operand.hbm [shape: bf16[1,32], index: 4, kind: input, shape index: {}]
  %s5 = inlined_call_operand.hbm [shape: bf16[1,32], index: 5, kind: input, shape index: {}]
  %s6 = inlined_call_operand.hbm [shape: bf16[1,32], index: 6, kind: input, shape index: {}]
  %s7 = inlined_call_operand.hbm [shape: bf16[32,64], index: 7, kind: input, shape index: {}]
  %s8 = inlined_call_operand.hbm [shape: bf16[1,64], index: 8, kind: input, shape index: {}]
  %s9 = inlined_call_operand.hbm [shape: bf16[64,32], index: 9, kind: input, shape index: {}]
  %s10 = inlined_call_operand.hbm [shape: bf16[1,32], index: 10, kind: input, shape index: {}]
  %s11 = inlined_call_operand.hbm [shape: bf16[1,32], index: 11, kind: input, shape index: {}]
  %s12 = inlined_call_operand.hbm [shape: bf16[1,32], index: 12, kind: input, shape index: {}]
  %s13 = inlined_call_operand.hbm [shape: bf16[2,17,32], index: 13, kind: output, shape index: {}]
  %s14 = sld [smem:[#allocation0]]
  $region137: #{vit_encoder_forward.5} parent=0
    _
  %s16 = ssub.s32 1, %s14
  %s17 = scalar_select 0, %s16, %s14
  $region1: #{vit_encoder_forward.5} parent=0
    #allocation2 [shape = 'u8[12288]{0}', space=vmem, size = 0x3000, scoped, tag = 'input window, operand 0']
    #allocation3 [shape = 's32[2]{0}', space=sflag, size = 0x8, scoped, tag = 'scoped memory for vit_encoder_forward.5']
    #allocation4 [shape = 's32[2]{0}', space=sflag, size = 0x8, scoped, tag = 'scoped memory for vit_encoder_forward.5']
    #allocation5 [shape = 'u8[8192]{0}', space=vmem, size = 0x2000, scoped, tag = 'input window, operand 1, single buffered']
    #allocation6 [shape = 's32[1]{0}', space=sflag, size = 0x4, scoped, tag = 'scoped memory for vit_encoder_forward.5']
    #allocation7 [shape = 'u8[512]{0}', space=vmem, size = 0x400, scoped, tag = 'input window, operand 2, single buffered']
    #allocation8 [shape = 'u8[8192]{0}', space=vmem, size = 0x2000, scoped, tag = 'input window, operand 3, single buffered']
    #allocation9 [shape = 's32[1]{0}', space=sflag, size = 0x4, scoped, tag = 'scoped memory for vit_encoder_forward.5']
    #allocation10 [shape = 'u8[512]{0}', space=vmem, size = 0x400, scoped, tag = 'input window, operand 4, single buffered']
    #allocation11 [shape = 'u8[512]{0}', space=vmem, size = 0x400, scoped, tag = 'input window, operand 5, single buffered']
    #allocation12 [shape = 's32[1]{0}', space=sflag, size = 0x4, scoped, tag = 'scoped memory for vit_encoder_forward.5']
    #allocation13 [shape = 'u8[512]{0}', space=vmem, size = 0x400, scoped, tag = 'input window, operand 6, single buffered']
    #allocation14 [shape = 'u8[8192]{0}', space=vmem, size = 0x2000, scoped, tag = 'input window, operand 7, single buffered']
    #allocation15 [shape = 's32[1]{0}', space=sflag, size = 0x4, scoped, tag = 'scoped memory for vit_encoder_forward.5']
    #allocation16 [shape = 'u8[512]{0}', space=vmem, size = 0x400, scoped, tag = 'input window, operand 8, single buffered']
    #allocation17 [shape = 'u8[16384]{0}', space=vmem, size = 0x4000, scoped, tag = 'input window, operand 9, single buffered']
    #allocation18 [shape = 's32[1]{0}', space=sflag, size = 0x4, scoped, tag = 'scoped memory for vit_encoder_forward.5']
    #allocation19 [shape = 'u8[512]{0}', space=vmem, size = 0x400, scoped, tag = 'input window, operand 10, single buffered']
    #allocation20 [shape = 'u8[512]{0}', space=vmem, size = 0x400, scoped, tag = 'input window, operand 11, single buffered']
    #allocation21 [shape = 's32[1]{0}', space=sflag, size = 0x4, scoped, tag = 'scoped memory for vit_encoder_forward.5']
    #allocation22 [shape = 'u8[512]{0}', space=vmem, size = 0x400, scoped, tag = 'input window, operand 12, single buffered']
    #allocation23 [shape = 'u8[12288]{0}', space=vmem, size = 0x3000, scoped, tag = 'output window, operand 0']
    %18 = vsyncpa [#allocation3], 0
    %s19 = scalar_lea.sflag [#allocation3], 1
    %20 = vsyncpa %s19, 0
    %21 = vsyncpa [#allocation6], 0
    %22 = vsyncpa [#allocation9], 0
    %23 = vsyncpa [#allocation12], 0
    %24 = vsyncpa [#allocation15], 0
    %25 = vsyncpa [#allocation18], 0
    %26 = vsyncpa [#allocation21], 0
    %27 = vsyncpa [#allocation4], 0
    %s28 = scalar_lea.sflag [#allocation4], 1
    %29 = vsyncpa %s28, 0
    loop: start=0, step=1, limit=4
    $region2: #{vit_encoder_forward.5} parent=1 // loop_pre_header
      _
    $region3: #{vit_encoder_forward.5} parent=1 // loop_header
      %s31 = sphi 0, %s35
      %p32 = scmp.ge.s32.totalorder %s31, 4
      %s41 = sphi 0, %s43
      %s44 = sphi 0, %s41
      %s45 = sphi 0, %s44
      %s61 = sphi 0, %s45
      %s65 = sphi 0, %s65
      %s67 = sphi 0, %s65
      %s68 = sphi 0, %s67
      %s82 = sphi 0, %s68
      %s86 = sphi 0, %s86
      %s88 = sphi 0, %s86
      %s89 = sphi 0, %s88
      %s103 = sphi 0, %s89
      %s107 = sphi 0, %s107
      %s109 = sphi 0, %s107
      %s110 = sphi 0, %s109
      %s124 = sphi 0, %s110
      %s128 = sphi 0, %s128
      %s130 = sphi 0, %s128
      %s131 = sphi 0, %s130
      %s145 = sphi 0, %s131
      %s149 = sphi 0, %s149
      %s151 = sphi 0, %s149
      %s152 = sphi 0, %s151
      %s166 = sphi 0, %s152
      %s170 = sphi 0, %s170
      %s172 = sphi 0, %s170
      %s173 = sphi 0, %s172
      %s187 = sphi 0, %s173
      %s191 = sphi 0, %s191
      %s193 = sphi 0, %s191
      %s194 = sphi 0, %s193
      %s208 = sphi 0, %s194
      %s212 = sphi 0, %s212
      %s214 = sphi 0, %s212
      %s215 = sphi 0, %s214
      %s229 = sphi 0, %s215
      %s233 = sphi 0, %s233
      %s235 = sphi 0, %s233
      %s236 = sphi 0, %s235
      %s250 = sphi 0, %s236
      %s254 = sphi 0, %s254
      %s256 = sphi 0, %s254
      %s257 = sphi 0, %s256
      %s271 = sphi 0, %s257
      %s275 = sphi 0, %s275
      %s277 = sphi 0, %s275
      %s278 = sphi 0, %s277
      %s292 = sphi 0, %s278
      %s296 = sphi 0, %s296
      %s298 = sphi 0, %s296
      %s299 = sphi 0, %s298
      %s313 = sphi 0, %s299
      %s319 = sphi 0, %s321
      %s322 = sphi 0, %s319
      %s323 = sphi 0, %s322
      %s339 = sphi 0, %s323
    $region4: #{vit_encoder_forward.5} parent=1 // loop_header_branch
      %34 = sbr.rel (%p32) target = $region8
    $region5: #{vit_encoder_forward.5} parent=1 // loop_body
      %s36 = ssub.s32 %s31, 1
      %s37 = ssub.s32 %s31, 2
      %s38 = sadd.s32 %s31, 1
      %s39 = ssub.s32 %s31, %s38
      %p40 = scmp.eq.s32.totalorder %s39, 0
      %s42 = sadd.s32 %s41, 1
      %s43 = scalar_select %p40, %s41, %s42
      %p46 = pneg %p40
      %p47 = scmp.eq.s32.totalorder %s31, 1
      %p48 = por %p46, %p47
      %p49 = scmp.ne.s32.totalorder %s41, %s44
      %p50 = scmp.eq.s32.totalorder %s31, 0
      %p51 = por %p49, %p50
      %p52 = scmp.ne.s32.totalorder %s41, %s44
      %p53 = scmp.eq.s32.totalorder %s36, 1
      %p54 = por %p52, %p53
      %p55 = scmp.ne.s32.totalorder %s44, %s45
      %p56 = scmp.eq.s32.totalorder %s36, 0
      %p57 = por %p55, %p56
      %p58 = scmp.ne.s32.totalorder %s44, %s45
      %p59 = scmp.eq.s32.totalorder %s37, 1
      %p60 = por %p58, %p59
      %p62 = scmp.ne.s32.totalorder %s45, %s61
      %p63 = scmp.eq.s32.totalorder %s37, 0
      %p64 = por %p62, %p63
      %s66 = sadd.s32 %s65, 1
      %p69 = scmp.eq.s32.totalorder %s31, 1
      %p70 = scmp.ne.s32.totalorder %s65, %s67
      %p71 = scmp.eq.s32.totalorder %s31, 0
      %p72 = por %p70, %p71
      %p73 = scmp.ne.s32.totalorder %s65, %s67
      %p74 = scmp.eq.s32.totalorder %s36, 1
      %p75 = por %p73, %p74
      %p76 = scmp.ne.s32.totalorder %s67, %s68
      %p77 = scmp.eq.s32.totalorder %s36, 0
      %p78 = por %p76, %p77
      %p79 = scmp.ne.s32.totalorder %s67, %s68
      %p80 = scmp.eq.s32.totalorder %s37, 1
      %p81 = por %p79, %p80
      %p83 = scmp.ne.s32.totalorder %s68, %s82
      %p84 = scmp.eq.s32.totalorder %s37, 0
      %p85 = por %p83, %p84
      %s87 = sadd.s32 %s86, 1
      %p90 = scmp.eq.s32.totalorder %s31, 1
      %p91 = scmp.ne.s32.totalorder %s86, %s88
      %p92 = scmp.eq.s32.totalorder %s31, 0
      %p93 = por %p91, %p92
      %p94 = scmp.ne.s32.totalorder %s86, %s88
      %p95 = scmp.eq.s32.totalorder %s36, 1
      %p96 = por %p94, %p95
      %p97 = scmp.ne.s32.totalorder %s88, %s89
      %p98 = scmp.eq.s32.totalorder %s36, 0
      %p99 = por %p97, %p98
      %p100 = scmp.ne.s32.totalorder %s88, %s89
      %p101 = scmp.eq.s32.totalorder %s37, 1
      %p102 = por %p100, %p101
      %p104 = scmp.ne.s32.totalorder %s89, %s103
      %p105 = scmp.eq.s32.totalorder %s37, 0
      %p106 = por %p104, %p105
      %s108 = sadd.s32 %s107, 1
      %p111 = scmp.eq.s32.totalorder %s31, 1
      %p112 = scmp.ne.s32.totalorder %s107, %s109
      %p113 = scmp.eq.s32.totalorder %s31, 0
      %p114 = por %p112, %p113
      %p115 = scmp.ne.s32.totalorder %s107, %s109
      %p116 = scmp.eq.s32.totalorder %s36, 1
      %p117 = por %p115, %p116
      %p118 = scmp.ne.s32.totalorder %s109, %s110
      %p119 = scmp.eq.s32.totalorder %s36, 0
      %p120 = por %p118, %p119
      %p121 = scmp.ne.s32.totalorder %s109, %s110
      %p122 = scmp.eq.s32.totalorder %s37, 1
      %p123 = por %p121, %p122
      %p125 = scmp.ne.s32.totalorder %s110, %s124
      %p126 = scmp.eq.s32.totalorder %s37, 0
      %p127 = por %p125, %p126
      %s129 = sadd.s32 %s128, 1
      %p132 = scmp.eq.s32.totalorder %s31, 1
      %p133 = scmp.ne.s32.totalorder %s128, %s130
      %p134 = scmp.eq.s32.totalorder %s31, 0
      %p135 = por %p133, %p134
      %p136 = scmp.ne.s32.totalorder %s128, %s130
      %p137 = scmp.eq.s32.totalorder %s36, 1
      %p138 = por %p136, %p137
      %p139 = scmp.ne.s32.totalorder %s130, %s131
      %p140 = scmp.eq.s32.totalorder %s36, 0
      %p141 = por %p139, %p140
      %p142 = scmp.ne.s32.totalorder %s130, %s131
      %p143 = scmp.eq.s32.totalorder %s37, 1
      %p144 = por %p142, %p143
      %p146 = scmp.ne.s32.totalorder %s131, %s145
      %p147 = scmp.eq.s32.totalorder %s37, 0
      %p148 = por %p146, %p147
      %s150 = sadd.s32 %s149, 1
      %p153 = scmp.eq.s32.totalorder %s31, 1
      %p154 = scmp.ne.s32.totalorder %s149, %s151
      %p155 = scmp.eq.s32.totalorder %s31, 0
      %p156 = por %p154, %p155
      %p157 = scmp.ne.s32.totalorder %s149, %s151
      %p158 = scmp.eq.s32.totalorder %s36, 1
      %p159 = por %p157, %p158
      %p160 = scmp.ne.s32.totalorder %s151, %s152
      %p161 = scmp.eq.s32.totalorder %s36, 0
      %p162 = por %p160, %p161
      %p163 = scmp.ne.s32.totalorder %s151, %s152
      %p164 = scmp.eq.s32.totalorder %s37, 1
      %p165 = por %p163, %p164
      %p167 = scmp.ne.s32.totalorder %s152, %s166
      %p168 = scmp.eq.s32.totalorder %s37, 0
      %p169 = por %p167, %p168
      %s171 = sadd.s32 %s170, 1
      %p174 = scmp.eq.s32.totalorder %s31, 1
      %p175 = scmp.ne.s32.totalorder %s170, %s172
      %p176 = scmp.eq.s32.totalorder %s31, 0
      %p177 = por %p175, %p176
      %p178 = scmp.ne.s32.totalorder %s170, %s172
      %p179 = scmp.eq.s32.totalorder %s36, 1
      %p180 = por %p178, %p179
      %p181 = scmp.ne.s32.totalorder %s172, %s173
      %p182 = scmp.eq.s32.totalorder %s36, 0
      %p183 = por %p181, %p182
      %p184 = scmp.ne.s32.totalorder %s172, %s173
      %p185 = scmp.eq.s32.totalorder %s37, 1
      %p186 = por %p184, %p185
      %p188 = scmp.ne.s32.totalorder %s173, %s187
      %p189 = scmp.eq.s32.totalorder %s37, 0
      %p190 = por %p188, %p189
      %s192 = sadd.s32 %s191, 1
      %p195 = scmp.eq.s32.totalorder %s31, 1
      %p196 = scmp.ne.s32.totalorder %s191, %s193
      %p197 = scmp.eq.s32.totalorder %s31, 0
      %p198 = por %p196, %p197
      %p199 = scmp.ne.s32.totalorder %s191, %s193
      %p200 = scmp.eq.s32.totalorder %s36, 1
      %p201 = por %p199, %p200
      %p202 = scmp.ne.s32.totalorder %s193, %s194
      %p203 = scmp.eq.s32.totalorder %s36, 0
      %p204 = por %p202, %p203
      %p205 = scmp.ne.s32.totalorder %s193, %s194
      %p206 = scmp.eq.s32.totalorder %s37, 1
      %p207 = por %p205, %p206
      %p209 = scmp.ne.s32.totalorder %s194, %s208
      %p210 = scmp.eq.s32.totalorder %s37, 0
      %p211 = por %p209, %p210
      %s213 = sadd.s32 %s212, 1
      %p216 = scmp.eq.s32.totalorder %s31, 1
      %p217 = scmp.ne.s32.totalorder %s212, %s214
      %p218 = scmp.eq.s32.totalorder %s31, 0
      %p219 = por %p217, %p218
      %p220 = scmp.ne.s32.totalorder %s212, %s214
      %p221 = scmp.eq.s32.totalorder %s36, 1
      %p222 = por %p220, %p221
      %p223 = scmp.ne.s32.totalorder %s214, %s215
      %p224 = scmp.eq.s32.totalorder %s36, 0
      %p225 = por %p223, %p224
      %p226 = scmp.ne.s32.totalorder %s214, %s215
      %p227 = scmp.eq.s32.totalorder %s37, 1
      %p228 = por %p226, %p227
      %p230 = scmp.ne.s32.totalorder %s215, %s229
      %p231 = scmp.eq.s32.totalorder %s37, 0
      %p232 = por %p230, %p231
      %s234 = sadd.s32 %s233, 1
      %p237 = scmp.eq.s32.totalorder %s31, 1
      %p238 = scmp.ne.s32.totalorder %s233, %s235
      %p239 = scmp.eq.s32.totalorder %s31, 0
      %p240 = por %p238, %p239
      %p241 = scmp.ne.s32.totalorder %s233, %s235
      %p242 = scmp.eq.s32.totalorder %s36, 1
      %p243 = por %p241, %p242
      %p244 = scmp.ne.s32.totalorder %s235, %s236
      %p245 = scmp.eq.s32.totalorder %s36, 0
      %p246 = por %p244, %p245
      %p247 = scmp.ne.s32.totalorder %s235, %s236
      %p248 = scmp.eq.s32.totalorder %s37, 1
      %p249 = por %p247, %p248
      %p251 = scmp.ne.s32.totalorder %s236, %s250
      %p252 = scmp.eq.s32.totalorder %s37, 0
      %p253 = por %p251, %p252
      %s255 = sadd.s32 %s254, 1
      %p258 = scmp.eq.s32.totalorder %s31, 1
      %p259 = scmp.ne.s32.totalorder %s254, %s256
      %p260 = scmp.eq.s32.totalorder %s31, 0
      %p261 = por %p259, %p260
      %p262 = scmp.ne.s32.totalorder %s254, %s256
      %p263 = scmp.eq.s32.totalorder %s36, 1
      %p264 = por %p262, %p263
      %p265 = scmp.ne.s32.totalorder %s256, %s257
      %p266 = scmp.eq.s32.totalorder %s36, 0
      %p267 = por %p265, %p266
      %p268 = scmp.ne.s32.totalorder %s256, %s257
      %p269 = scmp.eq.s32.totalorder %s37, 1
      %p270 = por %p268, %p269
      %p272 = scmp.ne.s32.totalorder %s257, %s271
      %p273 = scmp.eq.s32.totalorder %s37, 0
      %p274 = por %p272, %p273
      %s276 = sadd.s32 %s275, 1
      %p279 = scmp.eq.s32.totalorder %s31, 1
      %p280 = scmp.ne.s32.totalorder %s275, %s277
      %p281 = scmp.eq.s32.totalorder %s31, 0
      %p282 = por %p280, %p281
      %p283 = scmp.ne.s32.totalorder %s275, %s277
      %p284 = scmp.eq.s32.totalorder %s36, 1
      %p285 = por %p283, %p284
      %p286 = scmp.ne.s32.totalorder %s277, %s278
      %p287 = scmp.eq.s32.totalorder %s36, 0
      %p288 = por %p286, %p287
      %p289 = scmp.ne.s32.totalorder %s277, %s278
      %p290 = scmp.eq.s32.totalorder %s37, 1
      %p291 = por %p289, %p290
      %p293 = scmp.ne.s32.totalorder %s278, %s292
      %p294 = scmp.eq.s32.totalorder %s37, 0
      %p295 = por %p293, %p294
      %s297 = sadd.s32 %s296, 1
      %p300 = scmp.eq.s32.totalorder %s31, 1
      %p301 = scmp.ne.s32.totalorder %s296, %s298
      %p302 = scmp.eq.s32.totalorder %s31, 0
      %p303 = por %p301, %p302
      %p304 = scmp.ne.s32.totalorder %s296, %s298
      %p305 = scmp.eq.s32.totalorder %s36, 1
      %p306 = por %p304, %p305
      %p307 = scmp.ne.s32.totalorder %s298, %s299
      %p308 = scmp.eq.s32.totalorder %s36, 0
      %p309 = por %p307, %p308
      %p310 = scmp.ne.s32.totalorder %s298, %s299
      %p311 = scmp.eq.s32.totalorder %s37, 1
      %p312 = por %p310, %p311
      %p314 = scmp.ne.s32.totalorder %s299, %s313
      %p315 = scmp.eq.s32.totalorder %s37, 0
      %p316 = por %p314, %p315
      %s317 = ssub.s32 %s31, %s38
      %p318 = scmp.eq.s32.totalorder %s317, 0
      %s320 = sadd.s32 %s319, 1
      %s321 = scalar_select %p318, %s319, %s320
      %p324 = pneg %p318
      %p325 = scmp.eq.s32.totalorder %s31, 1
      %p326 = por %p324, %p325
      %p327 = scmp.ne.s32.totalorder %s319, %s322
      %p328 = scmp.eq.s32.totalorder %s31, 0
      %p329 = por %p327, %p328
      %p330 = scmp.ne.s32.totalorder %s319, %s322
      %p331 = scmp.eq.s32.totalorder %s36, 1
      %p332 = por %p330, %p331
      %p333 = scmp.ne.s32.totalorder %s322, %s323
      %p334 = scmp.eq.s32.totalorder %s36, 0
      %p335 = por %p333, %p334
      %p336 = scmp.ne.s32.totalorder %s322, %s323
      %p337 = scmp.eq.s32.totalorder %s37, 1
      %p338 = por %p336, %p337
      %p340 = scmp.ne.s32.totalorder %s323, %s339
      %p341 = scmp.eq.s32.totalorder %s37, 0
      %p342 = por %p340, %p341
      %p343 = scmp.le.s32.totalorder 1, %s31
      %p344 = scmp.lt.s32.totalorder %s31, 3
      %p345 = pnand %p343, %p344
      %p346 = pneg %p345
      // Predicated region
      $region9: #{vit_encoder_forward.5} parent=5 // pred_check
        _
      $region10: #{vit_encoder_forward.5} parent=5 // pred_check_branch
        %348 = sbr.rel (%p345) target = $region12
      $region11: #{vit_encoder_forward.5} parent=5 // pred_region
        %s349 = ssub.s32 %s31, 1
        // Predicated region
        $region13: #{vit_encoder_forward.5} parent=11 // pred_check
          %p350 = pneg %p78
        $region14: #{vit_encoder_forward.5} parent=11 // pred_check_branch
          %352 = sbr.rel (%p350) target = $region16
        $region15: #{vit_encoder_forward.5} parent=11 // pred_region
          %s354 = ssub.s32 256, 256
          %355 = vsyncadd [#allocation6], %s354
          %s356 = sshll.u32 [#allocation5], 4
          %s357 = int_to_ptr.vmem [resolvable:$true] %s356
          %362 = dma.hbm_to_vmem [thread:$0]  %s1, 256, %s357, [#allocation6], 64, 64, 4
        $region16: #{vit_encoder_forward.5} parent=11 // pred_fallthru
          _
        // Predicated region
        $region17: #{vit_encoder_forward.5} parent=11 // pred_check
          %p363 = pneg %p99
        $region18: #{vit_encoder_forward.5} parent=11 // pred_check_branch
          %365 = sbr.rel (%p363) target = $region20
        $region19: #{vit_encoder_forward.5} parent=11 // pred_region
          %s367 = ssub.s32 16, 16
          %368 = vsyncadd [#allocation6], %s367
          %s370 = sshll.u32 [#allocation7], 4
          %s371 = int_to_ptr.vmem [resolvable:$true] %s370
          %373 = dma.hbm_to_vmem [thread:$0]  %s2, 16, %s371, [#allocation6]
        $region20: #{vit_encoder_forward.5} parent=11 // pred_fallthru
          _
        // Predicated region
        $region21: #{vit_encoder_forward.5} parent=11 // pred_check
          %p374 = pneg %p120
        $region22: #{vit_encoder_forward.5} parent=11 // pred_check_branch
          %376 = sbr.rel (%p374) target = $region24
        $region23: #{vit_encoder_forward.5} parent=11 // pred_region
          %s378 = ssub.s32 256, 256
          %379 = vsyncadd [#allocation9], %s378
          %s380 = sshll.u32 [#allocation8], 4
          %s381 = int_to_ptr.vmem [resolvable:$true] %s380
          %386 = dma.hbm_to_vmem [thread:$0]  %s3, 256, %s381, [#allocation9], 64, 64, 4
        $region24: #{vit_encoder_forward.5} parent=11 // pred_fallthru
          _
        // Predicated region
        $region25: #{vit_encoder_forward.5} parent=11 // pred_check
          %p387 = pneg %p141
        $region26: #{vit_encoder_forward.5} parent=11 // pred_check_branch
          %389 = sbr.rel (%p387) target = $region28
        $region27: #{vit_encoder_forward.5} parent=11 // pred_region
          %s391 = ssub.s32 16, 16
          %392 = vsyncadd [#allocation9], %s391
          %s394 = sshll.u32 [#allocation10], 4
          %s395 = int_to_ptr.vmem [resolvable:$true] %s394
          %397 = dma.hbm_to_vmem [thread:$0]  %s4, 16, %s395, [#allocation9]
        $region28: #{vit_encoder_forward.5} parent=11 // pred_fallthru
          _
        // Predicated region
        $region29: #{vit_encoder_forward.5} parent=11 // pred_check
          %p398 = pneg %p162
        $region30: #{vit_encoder_forward.5} parent=11 // pred_check_branch
          %400 = sbr.rel (%p398) target = $region32
        $region31: #{vit_encoder_forward.5} parent=11 // pred_region
          %s402 = ssub.s32 16, 16
          %403 = vsyncadd [#allocation12], %s402
          %s405 = sshll.u32 [#allocation11], 4
          %s406 = int_to_ptr.vmem [resolvable:$true] %s405
          %408 = dma.hbm_to_vmem [thread:$0]  %s5, 16, %s406, [#allocation12]
        $region32: #{vit_encoder_forward.5} parent=11 // pred_fallthru
          _
        // Predicated region
        $region33: #{vit_encoder_forward.5} parent=11 // pred_check
          %p409 = pneg %p183
        $region34: #{vit_encoder_forward.5} parent=11 // pred_check_branch
          %411 = sbr.rel (%p409) target = $region36
        $region35: #{vit_encoder_forward.5} parent=11 // pred_region
          %s413 = ssub.s32 16, 16
          %414 = vsyncadd [#allocation12], %s413
          %s416 = sshll.u32 [#allocation13], 4
          %s417 = int_to_ptr.vmem [resolvable:$true] %s416
          %419 = dma.hbm_to_vmem [thread:$0]  %s6, 16, %s417, [#allocation12]
        $region36: #{vit_encoder_forward.5} parent=11 // pred_fallthru
          _
        // Predicated region
        $region37: #{vit_encoder_forward.5} parent=11 // pred_check
          %p420 = pneg %p204
        $region38: #{vit_encoder_forward.5} parent=11 // pred_check_branch
          %422 = sbr.rel (%p420) target = $region40
        $region39: #{vit_encoder_forward.5} parent=11 // pred_region
          %s424 = ssub.s32 256, 256
          %425 = vsyncadd [#allocation15], %s424
          %s426 = sshll.u32 [#allocation14], 4
          %s427 = int_to_ptr.vmem [resolvable:$true] %s426
          %432 = dma.hbm_to_vmem [thread:$0]  %s7, 256, %s427, [#allocation15], 64, 64, 4
        $region40: #{vit_encoder_forward.5} parent=11 // pred_fallthru
          _
        // Predicated region
        $region41: #{vit_encoder_forward.5} parent=11 // pred_check
          %p433 = pneg %p225
        $region42: #{vit_encoder_forward.5} parent=11 // pred_check_branch
          %435 = sbr.rel (%p433) target = $region44
        $region43: #{vit_encoder_forward.5} parent=11 // pred_region
          %s437 = ssub.s32 16, 16
          %438 = vsyncadd [#allocation15], %s437
          %s440 = sshll.u32 [#allocation16], 4
          %s441 = int_to_ptr.vmem [resolvable:$true] %s440
          %443 = dma.hbm_to_vmem [thread:$0]  %s8, 16, %s441, [#allocation15]
        $region44: #{vit_encoder_forward.5} parent=11 // pred_fallthru
          _
        // Predicated region
        $region45: #{vit_encoder_forward.5} parent=11 // pred_check
          %p444 = pneg %p246
        $region46: #{vit_encoder_forward.5} parent=11 // pred_check_branch
          %446 = sbr.rel (%p444) target = $region48
        $region47: #{vit_encoder_forward.5} parent=11 // pred_region
          %s448 = ssub.s32 512, 512
          %449 = vsyncadd [#allocation18], %s448
          %s450 = sshll.u32 [#allocation17], 4
          %s451 = int_to_ptr.vmem [resolvable:$true] %s450
          %456 = dma.hbm_to_vmem [thread:$0]  %s9, 512, %s451, [#allocation18], 64, 64, 4
        $region48: #{vit_encoder_forward.5} parent=11 // pred_fallthru
          _
        // Predicated region
        $region49: #{vit_encoder_forward.5} parent=11 // pred_check
          %p457 = pneg %p267
        $region50: #{vit_encoder_forward.5} parent=11 // pred_check_branch
          %459 = sbr.rel (%p457) target = $region52
        $region51: #{vit_encoder_forward.5} parent=11 // pred_region
          %s461 = ssub.s32 16, 16
          %462 = vsyncadd [#allocation18], %s461
          %s464 = sshll.u32 [#allocation19], 4
          %s465 = int_to_ptr.vmem [resolvable:$true] %s464
          %467 = dma.hbm_to_vmem [thread:$0]  %s10, 16, %s465, [#allocation18]
        $region52: #{vit_encoder_forward.5} parent=11 // pred_fallthru
          _
        // Predicated region
        $region53: #{vit_encoder_forward.5} parent=11 // pred_check
          %p468 = pneg %p288
        $region54: #{vit_encoder_forward.5} parent=11 // pred_check_branch
          %470 = sbr.rel (%p468) target = $region56
        $region55: #{vit_encoder_forward.5} parent=11 // pred_region
          %s472 = ssub.s32 16, 16
          %473 = vsyncadd [#allocation21], %s472
          %s475 = sshll.u32 [#allocation20], 4
          %s476 = int_to_ptr.vmem [resolvable:$true] %s475
          %478 = dma.hbm_to_vmem [thread:$0]  %s11, 16, %s476, [#allocation21]
        $region56: #{vit_encoder_forward.5} parent=11 // pred_fallthru
          _
        // Predicated region
        $region57: #{vit_encoder_forward.5} parent=11 // pred_check
          %p479 = pneg %p309
        $region58: #{vit_encoder_forward.5} parent=11 // pred_check_branch
          %481 = sbr.rel (%p479) target = $region60
        $region59: #{vit_encoder_forward.5} parent=11 // pred_region
          %s483 = ssub.s32 16, 16
          %484 = vsyncadd [#allocation21], %s483
          %s486 = sshll.u32 [#allocation22], 4
          %s487 = int_to_ptr.vmem [resolvable:$true] %s486
          %489 = dma.hbm_to_vmem [thread:$0]  %s12, 16, %s487, [#allocation21]
        $region60: #{vit_encoder_forward.5} parent=11 // pred_fallthru
          _
      $region12: #{vit_encoder_forward.5} parent=5 // pred_fallthru
        _
      %p490 = scmp.lt.s32.totalorder %s31, 2
      // Predicated region
      $region61: #{vit_encoder_forward.5} parent=5 // pred_check
        %p491 = pneg %p490
      $region62: #{vit_encoder_forward.5} parent=5 // pred_check_branch
        %493 = sbr.rel (%p491) target = $region64
      $region63: #{vit_encoder_forward.5} parent=5 // pred_region
        // Predicated region
        $region65: #{vit_encoder_forward.5} parent=63 // pred_check
          %p494 = pneg %p51
        $region66: #{vit_encoder_forward.5} parent=63 // pred_check_branch
          %496 = sbr.rel (%p494) target = $region68
        $region67: #{vit_encoder_forward.5} parent=63 // pred_region
          %s497 = sand.u32 %s41, 1
          %s498 = scalar_lea.sflag [#allocation3], %s497
          %s499 = sand.u32 %s41, 1
          %s500 = smul.addr %s499, 12
          %s501 = scalar_lea.vmem [#allocation2], %s500
          %s503 = ssub.s32 192, 192
          %504 = vsyncadd %s498, %s503
          %s505 = smul.addr %s31, 3
          %s506 = smul.addr %s505, 64
          %s507 = scalar_lea.hbm %s0, %s506
          %s508 = sshll.u32 %s501, 4
          %s509 = int_to_ptr.vmem [resolvable:$true] %s508
          %514 = dma.hbm_to_vmem [thread:$0]  %s507, 192, %s509, %s498, 64, 64, 4
        $region68: #{vit_encoder_forward.5} parent=63 // pred_fallthru
          _
      $region64: #{vit_encoder_forward.5} parent=5 // pred_fallthru
        _
      %p515 = scmp.le.s32.totalorder 1, %s31
      %p516 = scmp.lt.s32.totalorder %s31, 3
      %p517 = pnand %p515, %p516
      %p518 = pneg %p517
      // Predicated region
      $region69: #{vit_encoder_forward.5} parent=5 // pred_check
        _
      $region70: #{vit_encoder_forward.5} parent=5 // pred_check_branch
        %520 = sbr.rel (%p517) target = $region72
      $region71: #{vit_encoder_forward.5} parent=5 // pred_region
        %s521 = ssub.s32 %s31, 1
        %s522 = sand.u32 %s44, 1
        %s523 = scalar_lea.sflag [#allocation3], %s522
        %s524 = sand.u32 %s44, 1
        %s525 = smul.addr %s524, 12
        %s526 = scalar_lea.vmem [#allocation2], %s525
        // Predicated region
        $region73: #{vit_encoder_forward.5} parent=71 // pred_check
          %p527 = pneg %p57
        $region74: #{vit_encoder_forward.5} parent=71 // pred_check_branch
          %529 = sbr.rel (%p527) target = $region76
        $region75: #{vit_encoder_forward.5} parent=71 // pred_region
          %530 = dma.done %s523, 192
        $region76: #{vit_encoder_forward.5} parent=71 // pred_fallthru
          _
        // Predicated region
        $region77: #{vit_encoder_forward.5} parent=71 // pred_check
          %p531 = pneg %p78
        $region78: #{vit_encoder_forward.5} parent=71 // pred_check_branch
          %533 = sbr.rel (%p531) target = $region80
        $region79: #{vit_encoder_forward.5} parent=71 // pred_region
          %534 = dma.done [#allocation6], 256
        $region80: #{vit_encoder_forward.5} parent=71 // pred_fallthru
          _
        // Predicated region
        $region81: #{vit_encoder_forward.5} parent=71 // pred_check
          %p535 = pneg %p99
        $region82: #{vit_encoder_forward.5} parent=71 // pred_check_branch
          %537 = sbr.rel (%p535) target = $region84
        $region83: #{vit_encoder_forward.5} parent=71 // pred_region
          %538 = dma.done [#allocation6], 16
        $region84: #{vit_encoder_forward.5} parent=71 // pred_fallthru
          _
        // Predicated region
        $region85: #{vit_encoder_forward.5} parent=71 // pred_check
          %p539 = pneg %p120
        $region86: #{vit_encoder_forward.5} parent=71 // pred_check_branch
          %541 = sbr.rel (%p539) target = $region88
        $region87: #{vit_encoder_forward.5} parent=71 // pred_region
          %542 = dma.done [#allocation9], 256
        $region88: #{vit_encoder_forward.5} parent=71 // pred_fallthru
          _
        // Predicated region
        $region89: #{vit_encoder_forward.5} parent=71 // pred_check
          %p543 = pneg %p141
        $region90: #{vit_encoder_forward.5} parent=71 // pred_check_branch
          %545 = sbr.rel (%p543) target = $region92
        $region91: #{vit_encoder_forward.5} parent=71 // pred_region
          %546 = dma.done [#allocation9], 16
        $region92: #{vit_encoder_forward.5} parent=71 // pred_fallthru
          _
        // Predicated region
        $region93: #{vit_encoder_forward.5} parent=71 // pred_check
          %p547 = pneg %p162
        $region94: #{vit_encoder_forward.5} parent=71 // pred_check_branch
          %549 = sbr.rel (%p547) target = $region96
        $region95: #{vit_encoder_forward.5} parent=71 // pred_region
          %550 = dma.done [#allocation12], 16
        $region96: #{vit_encoder_forward.5} parent=71 // pred_fallthru
          _
        // Predicated region
        $region97: #{vit_encoder_forward.5} parent=71 // pred_check
          %p551 = pneg %p183
        $region98: #{vit_encoder_forward.5} parent=71 // pred_check_branch
          %553 = sbr.rel (%p551) target = $region100
        $region99: #{vit_encoder_forward.5} parent=71 // pred_region
          %554 = dma.done [#allocation12], 16
        $region100: #{vit_encoder_forward.5} parent=71 // pred_fallthru
          _
        // Predicated region
        $region101: #{vit_encoder_forward.5} parent=71 // pred_check
          %p555 = pneg %p204
        $region102: #{vit_encoder_forward.5} parent=71 // pred_check_branch
          %557 = sbr.rel (%p555) target = $region104
        $region103: #{vit_encoder_forward.5} parent=71 // pred_region
          %558 = dma.done [#allocation15], 256
        $region104: #{vit_encoder_forward.5} parent=71 // pred_fallthru
          _
        // Predicated region
        $region105: #{vit_encoder_forward.5} parent=71 // pred_check
          %p559 = pneg %p225
        $region106: #{vit_encoder_forward.5} parent=71 // pred_check_branch
          %561 = sbr.rel (%p559) target = $region108
        $region107: #{vit_encoder_forward.5} parent=71 // pred_region
          %562 = dma.done [#allocation15], 16
        $region108: #{vit_encoder_forward.5} parent=71 // pred_fallthru
          _
        // Predicated region
        $region109: #{vit_encoder_forward.5} parent=71 // pred_check
          %p563 = pneg %p246
        $region110: #{vit_encoder_forward.5} parent=71 // pred_check_branch
          %565 = sbr.rel (%p563) target = $region112
        $region111: #{vit_encoder_forward.5} parent=71 // pred_region
          %566 = dma.done [#allocation18], 512
        $region112: #{vit_encoder_forward.5} parent=71 // pred_fallthru
          _
        // Predicated region
        $region113: #{vit_encoder_forward.5} parent=71 // pred_check
          %p567 = pneg %p267
        $region114: #{vit_encoder_forward.5} parent=71 // pred_check_branch
          %569 = sbr.rel (%p567) target = $region116
        $region115: #{vit_encoder_forward.5} parent=71 // pred_region
          %570 = dma.done [#allocation18], 16
        $region116: #{vit_encoder_forward.5} parent=71 // pred_fallthru
          _
        // Predicated region
        $region117: #{vit_encoder_forward.5} parent=71 // pred_check
          %p571 = pneg %p288
        $region118: #{vit_encoder_forward.5} parent=71 // pred_check_branch
          %573 = sbr.rel (%p571) target = $region120
        $region119: #{vit_encoder_forward.5} parent=71 // pred_region
          %574 = dma.done [#allocation21], 16
        $region120: #{vit_encoder_forward.5} parent=71 // pred_fallthru
          _
        // Predicated region
        $region121: #{vit_encoder_forward.5} parent=71 // pred_check
          %p575 = pneg %p309
        $region122: #{vit_encoder_forward.5} parent=71 // pred_check_branch
          %577 = sbr.rel (%p575) target = $region124
        $region123: #{vit_encoder_forward.5} parent=71 // pred_region
          %578 = dma.done [#allocation21], 16
        $region124: #{vit_encoder_forward.5} parent=71 // pred_fallthru
          _
        %s579 = sand.u32 %s44, 1
        %s580 = scalar_lea.sflag [#allocation3], %s579
        %s581 = sand.u32 %s44, 1
        %s582 = smul.addr %s581, 12
        %s583 = scalar_lea.vmem [#allocation2], %s582
        %p584 = pneg %p57
        %p585 = pneg %p54
        %p586 = pneg %p78
        %p587 = pneg %p75
        %p588 = pneg %p99
        %p589 = pneg %p96
        %p590 = pneg %p120
        %p591 = pneg %p117
        %p592 = pneg %p141
        %p593 = pneg %p138
        %p594 = pneg %p162
        %p595 = pneg %p159
        %p596 = pneg %p183
        %p597 = pneg %p180
        %p598 = pneg %p204
        %p599 = pneg %p201
        %p600 = pneg %p225
        %p601 = pneg %p222
        %p602 = pneg %p246
        %p603 = pneg %p243
        %p604 = pneg %p267
        %p605 = pneg %p264
        %p606 = pneg %p288
        %p607 = pneg %p285
        %p608 = pneg %p309
        %p609 = pneg %p306
        %p610 = pneg %p335
        %p611 = pneg %p332
        %s612 = sand.u32 %s322, 1
        %s613 = scalar_lea.sflag [#allocation4], %s612
        %s614 = sand.u32 %s322, 1
        %s615 = smul.addr %s614, 12
        %s616 = scalar_lea.vmem [#allocation23], %s615
        %v618 = vld [vmem:[%s526] sm:$0xf]
        %v619 = vld [vmem:[%s526 + $0x4] sm:$0xf]
        %v620 = vld [vmem:[%s526 + $0x8] sm:$0x1]
        %v621 = vunpack.c.l.bf16 %v618
        %v622 = vunpack.c.l.bf16 %v619
        %v623 = vunpack.c.l.bf16 %v620
        %v624 = vld [vmem:[#allocation5] sm:$0xf]
        %v625 = vld [vmem:[#allocation5 + $0x4] sm:$0xf]
        %v626 = vld [vmem:[#allocation5 + $0x8] sm:$0xf]
        %v627 = vld [vmem:[#allocation5 + $0xc] sm:$0xf]
        %v628 = vld [vmem:[#allocation7] sm:$0x1]
        %v629 = vunpack.c.l.bf16 %v628
        %v630 = vlaneseq
        %v631 = vshrl.u32 %v630, 7
        %v632 = vsub.s32 0, %v631
        %v633 = vrot.slane %v629, %v632
        %v637 = vunpack.c.l.b16 %v618
        %v638 = vunpack.c.l.b16 %v619
        %v639 = vunpack.c.l.b16 %v620
        %v640 = vpack.c.b16 %v638, %v637
        %v641 = vpack.c.b16 %v639, %v639
        %v646 = vunpack.c.l.b16 %v624
        %v647 = vunpack.c.l.b16 %v625
        %v648 = vunpack.c.l.b16 %v626
        %v649 = vunpack.c.l.b16 %v627
        %v650 = vpack.c.b16 %v647, %v646
        %v651 = vpack.c.b16 %v649, %v648
        %vm654 = vcmask 261120
        %v656 = vsel %vm654, %v640, 0
        %v659 = vsel %vm654, %v641, 0
        %661 = vmatprep.subr.bf16.mxu0 0
        %662 = vmatpush1.bf16.msra.mxu0 %v650
        %663 = vmatprep.subr.bf16.mxu0 0
        %664 = vmatpush1.bf16.msra.mxu0 %v651
        %665 = vmatprep.subr.bf16.mxu0 0
        %666 = vmatpush1.bf16.msra.mxu0 0
        %667 = vmatprep.subr.bf16.mxu0 0
        %668 = vmatpush1.bf16.msra.mxu0 0
        %669 = vmatprep.subr.bf16.mxu0 0
        %670 = vmatpush1.bf16.msra.mxu0 0
        %671 = vmatprep.subr.bf16.mxu0 0
        %672 = vmatpush1.bf16.msra.mxu0 0
        %673 = vmatprep.subr.bf16.mxu0 0
        %674 = vmatpush1.bf16.msra.mxu0 0
        %675 = vmatprep.subr.bf16.mxu0 0
        %676 = vmatpush1.bf16.msra.mxu0 0
        %677 = vmatprep.subr.bf16.mxu0 0
        %678 = vmatpush1.bf16.msra.mxu0 0
        %679 = vmatprep.subr.bf16.mxu0 0
        %680 = vmatpush1.bf16.msra.mxu0 0
        %681 = vmatprep.subr.bf16.mxu0 0
        %682 = vmatpush1.bf16.msra.mxu0 0
        %683 = vmatprep.subr.bf16.mxu0 0
        %684 = vmatpush1.bf16.msra.mxu0 0
        %685 = vmatprep.subr.bf16.mxu0 0
        %686 = vmatpush1.bf16.msra.mxu0 0
        %687 = vmatprep.subr.bf16.mxu0 0
        %688 = vmatpush1.bf16.msra.mxu0 0
        %689 = vmatprep.subr.bf16.mxu0 0
        %690 = vmatpush1.bf16.msra.mxu0 0
        %691 = vmatprep.subr.bf16.mxu0 0
        %692 = vmatpush1.bf16.msra.mxu0 0
        %693 = vmatprep.mubr.bf16.mxu0 0
        %694 = vmatmul.mubr.bf16.gmra.mrb[0].mxu0 %v656
        %v695 = vpop.f32.mrb[0].mxu0
        %v696 = vadd.f32 %v633, %v695
        %v697 = vpop.f32.mrb[0].mxu0
        %v698 = vpop.f32.mrb[0].mxu0
        %v699 = vadd.f32 %v633, %v698
        %v700 = vpop.f32.mrb[0].mxu0
        %701 = vmatprep.mubr.bf16.mxu0 0
        %702 = vmatmul.mubr.bf16.gmra.mrb[0].mxu0 %v659
        %v703 = vpop.f32.mrb[0].mxu0
        %v704 = vadd.f32 %v633, %v703
        %v705 = vpop.f32.mrb[0].mxu0
        %v706 = vpop.f32.mrb[0].mxu0
        %v707 = vpop.f32.mrb[0].mxu0
        %708 = vdwg.mxu0
        %v709 = vpack.c.bf16 %v699, %v696
        %v710 = vpack.c.bf16 %v704, %v704
        %713 = vrot.lane.b32.xlu0 %v709, 96
        %v714 = vpop.permute.xlu0 %713
        %715 = vrot.lane.b32.xlu0 %v710, 96
        %v716 = vpop.permute.xlu0 %715
        %vm717 = vcmask 64512
        %v719 = vsel %vm717, %v709, 0
        %v722 = vsel %vm717, %v710, 0
        %v725 = vsel %vm717, %v714, 0
        %v728 = vsel %vm717, %v716, 0
        %730 = vmatprep.subr.bf16.mxu0 0
        %731 = vmatpush1.bf16.xpose.msra.mxu0 %v725
        %732 = vmatprep.subr.bf16.mxu0 0
        %733 = vmatpush1.bf16.xpose.msra.mxu0 %v728
        %734 = vmatprep.subr.bf16.mxu0 0
        %735 = vmatpush1.bf16.xpose.msra.mxu0 0
        %736 = vmatprep.subr.bf16.mxu0 0
        %737 = vmatpush1.bf16.xpose.msra.mxu0 0
        %738 = vmatprep.subr.bf16.mxu0 0
        %739 = vmatpush1.bf16.xpose.msra.mxu0 0
        %740 = vmatprep.subr.bf16.mxu0 0
        %741 = vmatpush1.bf16.xpose.msra.mxu0 0
        %742 = vmatprep.subr.bf16.mxu0 0
        %743 = vmatpush1.bf16.xpose.msra.mxu0 0
        %744 = vmatprep.subr.bf16.mxu0 0
        %745 = vmatpush1.bf16.xpose.msra.mxu0 0
        %746 = vmatprep.subr.bf16.mxu0 0
        %747 = vmatpush1.bf16.xpose.msra.mxu0 0
        %748 = vmatprep.subr.bf16.mxu0 0
        %749 = vmatpush1.bf16.xpose.msra.mxu0 0
        %750 = vmatprep.subr.bf16.mxu0 0
        %751 = vmatpush1.bf16.xpose.msra.mxu0 0
        %752 = vmatprep.subr.bf16.mxu0 0
        %753 = vmatpush1.bf16.xpose.msra.mxu0 0
        %754 = vmatprep.subr.bf16.mxu0 0
        %755 = vmatpush1.bf16.xpose.msra.mxu0 0
        %756 = vmatprep.subr.bf16.mxu0 0
        %757 = vmatpush1.bf16.xpose.msra.mxu0 0
        %758 = vmatprep.subr.bf16.mxu0 0
        %759 = vmatpush1.bf16.xpose.msra.mxu0 0
        %760 = vmatprep.subr.bf16.mxu0 0
        %761 = vmatpush1.bf16.xpose.msra.mxu0 0
        %762 = vmatprep.mubr.bf16.mxu0 0
        %763 = vmatmul.mubr.bf16.gmra.mrb[0].mxu0 %v719
        %v764 = vpop.f32.mrb[0].mxu0
        %v765 = vadd.f32 0.0, %v764
        %v766 = vpop.f32.mrb[0].mxu0
        %v767 = vpop.f32.mrb[0].mxu0
        %v768 = vadd.f32 0.0, %v767
        %v769 = vpop.f32.mrb[0].mxu0
        %770 = vmatprep.mubr.bf16.mxu0 0
        %771 = vmatmul.mubr.bf16.gmra.mrb[0].mxu0 %v722
        %v772 = vpop.f32.mrb[0].mxu0
        %v773 = vadd.f32 0.0, %v772
        %v774 = vpop.f32.mrb[0].mxu0
        %v775 = vpop.f32.mrb[0].mxu0
        %v776 = vpop.f32.mrb[0].mxu0
        %777 = vdwg.mxu0
        %v778 = vmul.f32 %v765, 0.35355338
        %v779 = vmul.f32 %v768, 0.35355338
        %v780 = vmul.f32 %v773, 0.35355338
        %vm781 = vcmask 138240
        %v782 = vsel %vm781, %v778, -inf
        %783 = vmax.xlane.f32.xlu0 %v782
        %v784 = vpop.xlane.xlu0 %783
        %v785 = vsel %vm781, %v779, -inf
        %786 = vmax.xlane.f32.xlu0 %v785
        %v787 = vpop.xlane.xlu0 %786
        %vm788 = vcmask 131072
        %v789 = vsel %vm788, %v780, -inf
        %790 = vmax.xlane.f32.xlu0 %v789
        %v791 = vpop.xlane.xlu0 %790
        %v792 = vsub.f32 %v778, %v784
        %v793 = vsub.f32 %v779, %v787
        %v794 = vsub.f32 %v780, %v791
        %v795 = vmul.f32 %v792, 1.442695
        %v796 = vpow.pop %v795
        %v797 = vmul.f32 %v793, 1.442695
        %v798 = vpow.pop %v797
        %v799 = vmul.f32 %v794, 1.442695
        %v800 = vpow.pop %v799
        %v801 = vsel %vm781, %v796, 0.0
        %802 = vadd.xlane.f32.xlu0 %v801
        %v803 = vpop.xlane.xlu0 %802
        %v804 = vsel %vm781, %v798, 0.0
        %805 = vadd.xlane.f32.xlu0 %v804
        %v806 = vpop.xlane.xlu0 %805
        %v807 = vsel %vm788, %v800, 0.0
        %808 = vadd.xlane.f32.xlu0 %v807
        %v809 = vpop.xlane.xlu0 %808
        %v810 = vrcp.pop %v803
        %v811 = vrcp.pop %v806
        %v812 = vrcp.pop %v809
        %v813 = vmul.f32 %v796, %v810
        %v814 = vmul.f32 %v798, %v811
        %v815 = vmul.f32 %v800, %v812
        %v816 = vpack.c.bf16 %v814, %v813
        %v817 = vpack.c.bf16 %v815, %v815
        %818 = vrot.lane.b32.xlu0 %v709, 64
        %v819 = vpop.permute.xlu0 %818
        %820 = vrot.lane.b32.xlu0 %v710, 64
        %v821 = vpop.permute.xlu0 %820
        %v824 = vsel %vm781, %v816, 0
        %v827 = vsel %vm781, %v817, 0
        %vm829 = vcmask 1040384
        %v830 = vsel 0, 4294967295, 65535
        %v831 = vsel %vm829, %v830, 0
        %v833 = vand.u32 %v821, %v831
        %835 = vmatprep.subr.bf16.mxu0 0
        %836 = vmatpush1.bf16.msra.mxu0 %v819
        %837 = vmatprep.subr.bf16.mxu0 0
        %838 = vmatpush1.bf16.msra.mxu0 %v833
        %839 = vmatprep.subr.bf16.mxu0 0
        %840 = vmatpush1.bf16.msra.mxu0 0
        %841 = vmatprep.subr.bf16.mxu0 0
        %842 = vmatpush1.bf16.msra.mxu0 0
        %843 = vmatprep.subr.bf16.mxu0 0
        %844 = vmatpush1.bf16.msra.mxu0 0
        %845 = vmatprep.subr.bf16.mxu0 0
        %846 = vmatpush1.bf16.msra.mxu0 0
        %847 = vmatprep.subr.bf16.mxu0 0
        %848 = vmatpush1.bf16.msra.mxu0 0
        %849 = vmatprep.subr.bf16.mxu0 0
        %850 = vmatpush1.bf16.msra.mxu0 0
        %851 = vmatprep.subr.bf16.mxu0 0
        %852 = vmatpush1.bf16.msra.mxu0 0
        %853 = vmatprep.subr.bf16.mxu0 0
        %854 = vmatpush1.bf16.msra.mxu0 0
        %855 = vmatprep.subr.bf16.mxu0 0
        %856 = vmatpush1.bf16.msra.mxu0 0
        %857 = vmatprep.subr.bf16.mxu0 0
        %858 = vmatpush1.bf16.msra.mxu0 0
        %859 = vmatprep.subr.bf16.mxu0 0
        %860 = vmatpush1.bf16.msra.mxu0 0
        %861 = vmatprep.subr.bf16.mxu0 0
        %862 = vmatpush1.bf16.msra.mxu0 0
        %863 = vmatprep.subr.bf16.mxu0 0
        %864 = vmatpush1.bf16.msra.mxu0 0
        %865 = vmatprep.subr.bf16.mxu0 0
        %866 = vmatpush1.bf16.msra.mxu0 0
        %867 = vmatprep.mubr.bf16.mxu0 0
        %868 = vmatmul.mubr.bf16.gmra.mrb[0].mxu0 %v824
        %v869 = vpop.f32.mrb[0].mxu0
        %v870 = vadd.f32 0.0, %v869
        %v871 = vpop.f32.mrb[0].mxu0
        %v872 = vpop.f32.mrb[0].mxu0
        %v873 = vadd.f32 0.0, %v872
        %v874 = vpop.f32.mrb[0].mxu0
        %875 = vmatprep.mubr.bf16.mxu0 0
        %876 = vmatmul.mubr.bf16.gmra.mrb[0].mxu0 %v827
        %v877 = vpop.f32.mrb[0].mxu0
        %v878 = vadd.f32 0.0, %v877
        %v879 = vpop.f32.mrb[0].mxu0
        %v880 = vpop.f32.mrb[0].mxu0
        %v881 = vpop.f32.mrb[0].mxu0
        %882 = vdwg.mxu0
        %883 = vrot.lane.b32.xlu0 %v709, 120
        %v884 = vpop.permute.xlu0 %883
        %885 = vrot.lane.b32.xlu0 %v710, 120
        %v886 = vpop.permute.xlu0 %885
        %887 = vrot.lane.b32.xlu0 %v709, 88
        %v888 = vpop.permute.xlu0 %887
        %889 = vrot.lane.b32.xlu0 %v710, 88
        %v890 = vpop.permute.xlu0 %889
        %v892 = vsel %vm717, %v884, 0
        %v895 = vsel %vm717, %v886, 0
        %v898 = vsel %vm717, %v888, 0
        %v901 = vsel %vm717, %v890, 0
        %903 = vmatprep.subr.bf16.mxu0 0
        %904 = vmatpush1.bf16.xpose.msra.mxu0 %v898
        %905 = vmatprep.subr.bf16.mxu0 0
        %906 = vmatpush1.bf16.xpose.msra.mxu0 %v901
        %907 = vmatprep.subr.bf16.mxu0 0
        %908 = vmatpush1.bf16.xpose.msra.mxu0 0
        %909 = vmatprep.subr.bf16.mxu0 0
        %910 = vmatpush1.bf16.xpose.msra.mxu0 0
        %911 = vmatprep.subr.bf16.mxu0 0
        %912 = vmatpush1.bf16.xpose.msra.mxu0 0
        %913 = vmatprep.subr.bf16.mxu0 0
        %914 = vmatpush1.bf16.xpose.msra.mxu0 0
        %915 = vmatprep.subr.bf16.mxu0 0
        %916 = vmatpush1.bf16.xpose.msra.mxu0 0
        %917 = vmatprep.subr.bf16.mxu0 0
        %918 = vmatpush1.bf16.xpose.msra.mxu0 0
        %919 = vmatprep.subr.bf16.mxu0 0
        %920 = vmatpush1.bf16.xpose.msra.mxu0 0
        %921 = vmatprep.subr.bf16.mxu0 0
        %922 = vmatpush1.bf16.xpose.msra.mxu0 0
        %923 = vmatprep.subr.bf16.mxu0 0
        %924 = vmatpush1.bf16.xpose.msra.mxu0 0
        %925 = vmatprep.subr.bf16.mxu0 0
        %926 = vmatpush1.bf16.xpose.msra.mxu0 0
        %927 = vmatprep.subr.bf16.mxu0 0
        %928 = vmatpush1.bf16.xpose.msra.mxu0 0
        %929 = vmatprep.subr.bf16.mxu0 0
        %930 = vmatpush1.bf16.xpose.msra.mxu0 0
        %931 = vmatprep.subr.bf16.mxu0 0
        %932 = vmatpush1.bf16.xpose.msra.mxu0 0
        %933 = vmatprep.subr.bf16.mxu0 0
        %934 = vmatpush1.bf16.xpose.msra.mxu0 0
        %935 = vmatprep.mubr.bf16.mxu0 0
        %936 = vmatmul.mubr.bf16.gmra.mrb[0].mxu0 %v892
        %v937 = vpop.f32.mrb[0].mxu0
        %v938 = vadd.f32 0.0, %v937
        %v939 = vpop.f32.mrb[0].mxu0
        %v940 = vpop.f32.mrb[0].mxu0
        %v941 = vadd.f32 0.0, %v940
        %v942 = vpop.f32.mrb[0].mxu0
        %943 = vmatprep.mubr.bf16.mxu0 0
        %944 = vmatmul.mubr.bf16.gmra.mrb[0].mxu0 %v895
        %v945 = vpop.f32.mrb[0].mxu0
        %v946 = vadd.f32 0.0, %v945
        %v947 = vpop.f32.mrb[0].mxu0
        %v948 = vpop.f32.mrb[0].mxu0
        %v949 = vpop.f32.mrb[0].mxu0
        %950 = vdwg.mxu0
        %v951 = vmul.f32 %v938, 0.35355338
        %v952 = vmul.f32 %v941, 0.35355338
        %v953 = vmul.f32 %v946, 0.35355338
        %v954 = vsel %vm781, %v951, -inf
        %955 = vmax.xlane.f32.xlu0 %v954
        %v956 = vpop.xlane.xlu0 %955
        %v957 = vsel %vm781, %v952, -inf
        %958 = vmax.xlane.f32.xlu0 %v957
        %v959 = vpop.xlane.xlu0 %958
        %v960 = vsel %vm788, %v953, -inf
        %961 = vmax.xlane.f32.xlu0 %v960
        %v962 = vpop.xlane.xlu0 %961
        %v963 = vsub.f32 %v951, %v956
        %v964 = vsub.f32 %v952, %v959
        %v965 = vsub.f32 %v953, %v962
        %v966 = vmul.f32 %v963, 1.442695
        %v967 = vpow.pop %v966
        %v968 = vmul.f32 %v964, 1.442695
        %v969 = vpow.pop %v968
        %v970 = vmul.f32 %v965, 1.442695
        %v971 = vpow.pop %v970
        %v972 = vsel %vm781, %v967, 0.0
        %973 = vadd.xlane.f32.xlu0 %v972
        %v974 = vpop.xlane.xlu0 %973
        %v975 = vsel %vm781, %v969, 0.0
        %976 = vadd.xlane.f32.xlu0 %v975
        %v977 = vpop.xlane.xlu0 %976
        %v978 = vsel %vm788, %v971, 0.0
        %979 = vadd.xlane.f32.xlu0 %v978
        %v980 = vpop.xlane.xlu0 %979
        %v981 = vrcp.pop %v974
        %v982 = vrcp.pop %v977
        %v983 = vrcp.pop %v980
        %v984 = vmul.f32 %v967, %v981
        %v985 = vmul.f32 %v969, %v982
        %v986 = vmul.f32 %v971, %v983
        %v987 = vpack.c.bf16 %v985, %v984
        %v988 = vpack.c.bf16 %v986, %v986
        %989 = vrot.lane.b32.xlu0 %v709, 56
        %v990 = vpop.permute.xlu0 %989
        %991 = vrot.lane.b32.xlu0 %v710, 56
        %v992 = vpop.permute.xlu0 %991
        %v995 = vsel %vm781, %v987, 0
        %v998 = vsel %vm781, %v988, 0
        %v1001 = vand.u32 %v992, %v831
        %1003 = vmatprep.subr.bf16.mxu0 0
        %1004 = vmatpush1.bf16.msra.mxu0 %v990
        %1005 = vmatprep.subr.bf16.mxu0 0
        %1006 = vmatpush1.bf16.msra.mxu0 %v1001
        %1007 = vmatprep.subr.bf16.mxu0 0
        %1008 = vmatpush1.bf16.msra.mxu0 0
        %1009 = vmatprep.subr.bf16.mxu0 0
        %1010 = vmatpush1.bf16.msra.mxu0 0
        %1011 = vmatprep.subr.bf16.mxu0 0
        %1012 = vmatpush1.bf16.msra.mxu0 0
        %1013 = vmatprep.subr.bf16.mxu0 0
        %1014 = vmatpush1.bf16.msra.mxu0 0
        %1015 = vmatprep.subr.bf16.mxu0 0
        %1016 = vmatpush1.bf16.msra.mxu0 0
        %1017 = vmatprep.subr.bf16.mxu0 0
        %1018 = vmatpush1.bf16.msra.mxu0 0
        %1019 = vmatprep.subr.bf16.mxu0 0
        %1020 = vmatpush1.bf16.msra.mxu0 0
        %1021 = vmatprep.subr.bf16.mxu0 0
        %1022 = vmatpush1.bf16.msra.mxu0 0
        %1023 = vmatprep.subr.bf16.mxu0 0
        %1024 = vmatpush1.bf16.msra.mxu0 0
        %1025 = vmatprep.subr.bf16.mxu0 0
        %1026 = vmatpush1.bf16.msra.mxu0 0
        %1027 = vmatprep.subr.bf16.mxu0 0
        %1028 = vmatpush1.bf16.msra.mxu0 0
        %1029 = vmatprep.subr.bf16.mxu0 0
        %1030 = vmatpush1.bf16.msra.mxu0 0
        %1031 = vmatprep.subr.bf16.mxu0 0
        %1032 = vmatpush1.bf16.msra.mxu0 0
        %1033 = vmatprep.subr.bf16.mxu0 0
        %1034 = vmatpush1.bf16.msra.mxu0 0
        %1035 = vmatprep.mubr.bf16.mxu0 0
        %1036 = vmatmul.mubr.bf16.gmra.mrb[0].mxu0 %v995
        %v1037 = vpop.f32.mrb[0].mxu0
        %v1038 = vadd.f32 0.0, %v1037
        %v1039 = vpop.f32.mrb[0].mxu0
        %v1040 = vpop.f32.mrb[0].mxu0
        %v1041 = vadd.f32 0.0, %v1040
        %v1042 = vpop.f32.mrb[0].mxu0
        %1043 = vmatprep.mubr.bf16.mxu0 0
        %1044 = vmatmul.mubr.bf16.gmra.mrb[0].mxu0 %v998
        %v1045 = vpop.f32.mrb[0].mxu0
        %v1046 = vadd.f32 0.0, %v1045
        %v1047 = vpop.f32.mrb[0].mxu0
        %v1048 = vpop.f32.mrb[0].mxu0
        %v1049 = vpop.f32.mrb[0].mxu0
        %1050 = vdwg.mxu0
        %1051 = vrot.lane.b32.xlu0 %v709, 112
        %v1052 = vpop.permute.xlu0 %1051
        %1053 = vrot.lane.b32.xlu0 %v710, 112
        %v1054 = vpop.permute.xlu0 %1053
        %1055 = vrot.lane.b32.xlu0 %v709, 80
        %v1056 = vpop.permute.xlu0 %1055
        %1057 = vrot.lane.b32.xlu0 %v710, 80
        %v1058 = vpop.permute.xlu0 %1057
        %v1060 = vsel %vm717, %v1052, 0
        %v1063 = vsel %vm717, %v1054, 0
        %v1066 = vsel %vm717, %v1056, 0
        %v1069 = vsel %vm717, %v1058, 0
        %1071 = vmatprep.subr.bf16.mxu0 0
        %1072 = vmatpush1.bf16.xpose.msra.mxu0 %v1066
        %1073 = vmatprep.subr.bf16.mxu0 0
        %1074 = vmatpush1.bf16.xpose.msra.mxu0 %v1069
        %1075 = vmatprep.subr.bf16.mxu0 0
        %1076 = vmatpush1.bf16.xpose.msra.mxu0 0
        %1077 = vmatprep.subr.bf16.mxu0 0
        %1078 = vmatpush1.bf16.xpose.msra.mxu0 0
        %1079 = vmatprep.subr.bf16.mxu0 0
        %1080 = vmatpush1.bf16.xpose.msra.mxu0 0
        %1081 = vmatprep.subr.bf16.mxu0 0
        %1082 = vmatpush1.bf16.xpose.msra.mxu0 0
        %1083 = vmatprep.subr.bf16.mxu0 0
        %1084 = vmatpush1.bf16.xpose.msra.mxu0 0
        %1085 = vmatprep.subr.bf16.mxu0 0
        %1086 = vmatpush1.bf16.xpose.msra.mxu0 0
        %1087 = vmatprep.subr.bf16.mxu0 0
        %1088 = vmatpush1.bf16.xpose.msra.mxu0 0
        %1089 = vmatprep.subr.bf16.mxu0 0
        %1090 = vmatpush1.bf16.xpose.msra.mxu0 0
        %1091 = vmatprep.subr.bf16.mxu0 0
        %1092 = vmatpush1.bf16.xpose.msra.mxu0 0
        %1093 = vmatprep.subr.bf16.mxu0 0
        %1094 = vmatpush1.bf16.xpose.msra.mxu0 0
        %1095 = vmatprep.subr.bf16.mxu0 0
        %1096 = vmatpush1.bf16.xpose.msra.mxu0 0
        %1097 = vmatprep.subr.bf16.mxu0 0
        %1098 = vmatpush1.bf16.xpose.msra.mxu0 0
        %1099 = vmatprep.subr.bf16.mxu0 0
        %1100 = vmatpush1.bf16.xpose.msra.mxu0 0
        %1101 = vmatprep.subr.bf16.mxu0 0
        %1102 = vmatpush1.bf16.xpose.msra.mxu0 0
        %1103 = vmatprep.mubr.bf16.mxu0 0
        %1104 = vmatmul.mubr.bf16.gmra.mrb[0].mxu0 %v1060
        %v1105 = vpop.f32.mrb[0].mxu0
        %v1106 = vadd.f32 0.0, %v1105
        %v1107 = vpop.f32.mrb[0].mxu0
        %v1108 = vpop.f32.mrb[0].mxu0
        %v1109 = vadd.f32 0.0, %v1108
        %v1110 = vpop.f32.mrb[0].mxu0
        %1111 = vmatprep.mubr.bf16.mxu0 0
        %1112 = vmatmul.mubr.bf16.gmra.mrb[0].mxu0 %v1063
        %v1113 = vpop.f32.mrb[0].mxu0
        %v1114 = vadd.f32 0.0, %v1113
        %v1115 = vpop.f32.mrb[0].mxu0
        %v1116 = vpop.f32.mrb[0].mxu0
        %v1117 = vpop.f32.mrb[0].mxu0
        %1118 = vdwg.mxu0
        %v1119 = vmul.f32 %v1106, 0.35355338
        %v1120 = vmul.f32 %v1109, 0.35355338
        %v1121 = vmul.f32 %v1114, 0.35355338
        %v1122 = vsel %vm781, %v1119, -inf
        %1123 = vmax.xlane.f32.xlu0 %v1122
        %v1124 = vpop.xlane.xlu0 %1123
        %v1125 = vsel %vm781, %v1120, -inf
        %1126 = vmax.xlane.f32.xlu0 %v1125
        %v1127 = vpop.xlane.xlu0 %1126
        %v1128 = vsel %vm788, %v1121, -inf
        %1129 = vmax.xlane.f32.xlu0 %v1128
        %v1130 = vpop.xlane.xlu0 %1129
        %v1131 = vsub.f32 %v1119, %v1124
        %v1132 = vsub.f32 %v1120, %v1127
        %v1133 = vsub.f32 %v1121, %v1130
        %v1134 = vmul.f32 %v1131, 1.442695
        %v1135 = vpow.pop %v1134
        %v1136 = vmul.f32 %v1132, 1.442695
        %v1137 = vpow.pop %v1136
        %v1138 = vmul.f32 %v1133, 1.442695
        %v1139 = vpow.pop %v1138
        %v1140 = vsel %vm781, %v1135, 0.0
        %1141 = vadd.xlane.f32.xlu0 %v1140
        %v1142 = vpop.xlane.xlu0 %1141
        %v1143 = vsel %vm781, %v1137, 0.0
        %1144 = vadd.xlane.f32.xlu0 %v1143
        %v1145 = vpop.xlane.xlu0 %1144
        %v1146 = vsel %vm788, %v1139, 0.0
        %1147 = vadd.xlane.f32.xlu0 %v1146
        %v1148 = vpop.xlane.xlu0 %1147
        %v1149 = vrcp.pop %v1142
        %v1150 = vrcp.pop %v1145
        %v1151 = vrcp.pop %v1148
        %v1152 = vmul.f32 %v1135, %v1149
        %v1153 = vmul.f32 %v1137, %v1150
        %v1154 = vmul.f32 %v1139, %v1151
        %v1155 = vpack.c.bf16 %v1153, %v1152
        %v1156 = vpack.c.bf16 %v1154, %v1154
        %1157 = vrot.lane.b32.xlu0 %v709, 48
        %v1158 = vpop.permute.xlu0 %1157
        %1159 = vrot.lane.b32.xlu0 %v710, 48
        %v1160 = vpop.permute.xlu0 %1159
        %v1163 = vsel %vm781, %v1155, 0
        %v1166 = vsel %vm781, %v1156, 0
        %v1169 = vand.u32 %v1160, %v831
        %1171 = vmatprep.subr.bf16.mxu0 0
        %1172 = vmatpush1.bf16.msra.mxu0 %v1158
        %1173 = vmatprep.subr.bf16.mxu0 0
        %1174 = vmatpush1.bf16.msra.mxu0 %v1169
        %1175 = vmatprep.subr.bf16.mxu0 0
        %1176 = vmatpush1.bf16.msra.mxu0 0
        %1177 = vmatprep.subr.bf16.mxu0 0
        %1178 = vmatpush1.bf16.msra.mxu0 0
        %1179 = vmatprep.subr.bf16.mxu0 0
        %1180 = vmatpush1.bf16.msra.mxu0 0
        %1181 = vmatprep.subr.bf16.mxu0 0
        %1182 = vmatpush1.bf16.msra.mxu0 0
        %1183 = vmatprep.subr.bf16.mxu0 0
        %1184 = vmatpush1.bf16.msra.mxu0 0
        %1185 = vmatprep.subr.bf16.mxu0 0
        %1186 = vmatpush1.bf16.msra.mxu0 0
        %1187 = vmatprep.subr.bf16.mxu0 0
        %1188 = vmatpush1.bf16.msra.mxu0 0
        %1189 = vmatprep.subr.bf16.mxu0 0
        %1190 = vmatpush1.bf16.msra.mxu0 0
        %1191 = vmatprep.subr.bf16.mxu0 0
        %1192 = vmatpush1.bf16.msra.mxu0 0
        %1193 = vmatprep.subr.bf16.mxu0 0
        %1194 = vmatpush1.bf16.msra.mxu0 0
        %1195 = vmatprep.subr.bf16.mxu0 0
        %1196 = vmatpush1.bf16.msra.mxu0 0
        %1197 = vmatprep.subr.bf16.mxu0 0
        %1198 = vmatpush1.bf16.msra.mxu0 0
        %1199 = vmatprep.subr.bf16.mxu0 0
        %1200 = vmatpush1.bf16.msra.mxu0 0
        %1201 = vmatprep.subr.bf16.mxu0 0
        %1202 = vmatpush1.bf16.msra.mxu0 0
        %1203 = vmatprep.mubr.bf16.mxu0 0
        %1204 = vmatmul.mubr.bf16.gmra.mrb[0].mxu0 %v1163
        %v1205 = vpop.f32.mrb[0].mxu0
        %v1206 = vadd.f32 0.0, %v1205
        %v1207 = vpop.f32.mrb[0].mxu0
        %v1208 = vpop.f32.mrb[0].mxu0
        %v1209 = vadd.f32 0.0, %v1208
        %v1210 = vpop.f32.mrb[0].mxu0
        %1211 = vmatprep.mubr.bf16.mxu0 0
        %1212 = vmatmul.mubr.bf16.gmra.mrb[0].mxu0 %v1166
        %v1213 = vpop.f32.mrb[0].mxu0
        %v1214 = vadd.f32 0.0, %v1213
        %v1215 = vpop.f32.mrb[0].mxu0
        %v1216 = vpop.f32.mrb[0].mxu0
        %v1217 = vpop.f32.mrb[0].mxu0
        %1218 = vdwg.mxu0
        %1219 = vrot.lane.b32.xlu0 %v709, 104
        %v1220 = vpop.permute.xlu0 %1219
        %1221 = vrot.lane.b32.xlu0 %v710, 104
        %v1222 = vpop.permute.xlu0 %1221
        %1223 = vrot.lane.b32.xlu0 %v709, 72
        %v1224 = vpop.permute.xlu0 %1223
        %1225 = vrot.lane.b32.xlu0 %v710, 72
        %v1226 = vpop.permute.xlu0 %1225
        %v1228 = vsel %vm717, %v1220, 0
        %v1231 = vsel %vm717, %v1222, 0
        %v1234 = vsel %vm717, %v1224, 0
        %v1237 = vsel %vm717, %v1226, 0
        %1239 = vmatprep.subr.bf16.mxu0 0
        %1240 = vmatpush1.bf16.xpose.msra.mxu0 %v1234
        %1241 = vmatprep.subr.bf16.mxu0 0
        %1242 = vmatpush1.bf16.xpose.msra.mxu0 %v1237
        %1243 = vmatprep.subr.bf16.mxu0 0
        %1244 = vmatpush1.bf16.xpose.msra.mxu0 0
        %1245 = vmatprep.subr.bf16.mxu0 0
        %1246 = vmatpush1.bf16.xpose.msra.mxu0 0
        %1247 = vmatprep.subr.bf16.mxu0 0
        %1248 = vmatpush1.bf16.xpose.msra.mxu0 0
        %1249 = vmatprep.subr.bf16.mxu0 0
        %1250 = vmatpush1.bf16.xpose.msra.mxu0 0
        %1251 = vmatprep.subr.bf16.mxu0 0
        %1252 = vmatpush1.bf16.xpose.msra.mxu0 0
        %1253 = vmatprep.subr.bf16.mxu0 0
        %1254 = vmatpush1.bf16.xpose.msra.mxu0 0
        %1255 = vmatprep.subr.bf16.mxu0 0
        %1256 = vmatpush1.bf16.xpose.msra.mxu0 0
        %1257 = vmatprep.subr.bf16.mxu0 0
        %1258 = vmatpush1.bf16.xpose.msra.mxu0 0
        %1259 = vmatprep.subr.bf16.mxu0 0
        %1260 = vmatpush1.bf16.xpose.msra.mxu0 0
        %1261 = vmatprep.subr.bf16.mxu0 0
        %1262 = vmatpush1.bf16.xpose.msra.mxu0 0
        %1263 = vmatprep.subr.bf16.mxu0 0
        %1264 = vmatpush1.bf16.xpose.msra.mxu0 0
        %1265 = vmatprep.subr.bf16.mxu0 0
        %1266 = vmatpush1.bf16.xpose.msra.mxu0 0
        %1267 = vmatprep.subr.bf16.mxu0 0
        %1268 = vmatpush1.bf16.xpose.msra.mxu0 0
        %1269 = vmatprep.subr.bf16.mxu0 0
        %1270 = vmatpush1.bf16.xpose.msra.mxu0 0
        %1271 = vmatprep.mubr.bf16.mxu0 0
        %1272 = vmatmul.mubr.bf16.gmra.mrb[0].mxu0 %v1228
        %v1273 = vpop.f32.mrb[0].mxu0
        %v1274 = vadd.f32 0.0, %v1273
        %v1275 = vpop.f32.mrb[0].mxu0
        %v1276 = vpop.f32.mrb[0].mxu0
        %v1277 = vadd.f32 0.0, %v1276
        %v1278 = vpop.f32.mrb[0].mxu0
        %1279 = vmatprep.mubr.bf16.mxu0 0
        %1280 = vmatmul.mubr.bf16.gmra.mrb[0].mxu0 %v1231
        %v1281 = vpop.f32.mrb[0].mxu0
        %v1282 = vadd.f32 0.0, %v1281
        %v1283 = vpop.f32.mrb[0].mxu0
        %v1284 = vpop.f32.mrb[0].mxu0
        %v1285 = vpop.f32.mrb[0].mxu0
        %1286 = vdwg.mxu0
        %v1287 = vmul.f32 %v1274, 0.35355338
        %v1288 = vmul.f32 %v1277, 0.35355338
        %v1289 = vmul.f32 %v1282, 0.35355338
        %v1290 = vsel %vm781, %v1287, -inf
        %1291 = vmax.xlane.f32.xlu0 %v1290
        %v1292 = vpop.xlane.xlu0 %1291
        %v1293 = vsel %vm781, %v1288, -inf
        %1294 = vmax.xlane.f32.xlu0 %v1293
        %v1295 = vpop.xlane.xlu0 %1294
        %v1296 = vsel %vm788, %v1289, -inf
        %1297 = vmax.xlane.f32.xlu0 %v1296
        %v1298 = vpop.xlane.xlu0 %1297
        %v1299 = vsub.f32 %v1287, %v1292
        %v1300 = vsub.f32 %v1288, %v1295
        %v1301 = vsub.f32 %v1289, %v1298
        %v1302 = vmul.f32 %v1299, 1.442695
        %v1303 = vpow.pop %v1302
        %v1304 = vmul.f32 %v1300, 1.442695
        %v1305 = vpow.pop %v1304
        %v1306 = vmul.f32 %v1301, 1.442695
        %v1307 = vpow.pop %v1306
        %v1308 = vsel %vm781, %v1303, 0.0
        %1309 = vadd.xlane.f32.xlu0 %v1308
        %v1310 = vpop.xlane.xlu0 %1309
        %v1311 = vsel %vm781, %v1305, 0.0
        %1312 = vadd.xlane.f32.xlu0 %v1311
        %v1313 = vpop.xlane.xlu0 %1312
        %v1314 = vsel %vm788, %v1307, 0.0
        %1315 = vadd.xlane.f32.xlu0 %v1314
        %v1316 = vpop.xlane.xlu0 %1315
        %v1317 = vrcp.pop %v1310
        %v1318 = vrcp.pop %v1313
        %v1319 = vrcp.pop %v1316
        %v1320 = vmul.f32 %v1303, %v1317
        %v1321 = vmul.f32 %v1305, %v1318
        %v1322 = vmul.f32 %v1307, %v1319
        %v1323 = vpack.c.bf16 %v1321, %v1320
        %v1324 = vpack.c.bf16 %v1322, %v1322
        %1325 = vrot.lane.b32.xlu0 %v709, 40
        %v1326 = vpop.permute.xlu0 %1325
        %1327 = vrot.lane.b32.xlu0 %v710, 40
        %v1328 = vpop.permute.xlu0 %1327
        %v1331 = vsel %vm781, %v1323, 0
        %v1334 = vsel %vm781, %v1324, 0
        %v1337 = vand.u32 %v1328, %v831
        %1339 = vmatprep.subr.bf16.mxu0 0
        %1340 = vmatpush1.bf16.msra.mxu0 %v1326
        %1341 = vmatprep.subr.bf16.mxu0 0
        %1342 = vmatpush1.bf16.msra.mxu0 %v1337
        %1343 = vmatprep.subr.bf16.mxu0 0
        %1344 = vmatpush1.bf16.msra.mxu0 0
        %1345 = vmatprep.subr.bf16.mxu0 0
        %1346 = vmatpush1.bf16.msra.mxu0 0
        %1347 = vmatprep.subr.bf16.mxu0 0
        %1348 = vmatpush1.bf16.msra.mxu0 0
        %1349 = vmatprep.subr.bf16.mxu0 0
        %1350 = vmatpush1.bf16.msra.mxu0 0
        %1351 = vmatprep.subr.bf16.mxu0 0
        %1352 = vmatpush1.bf16.msra.mxu0 0
        %1353 = vmatprep.subr.bf16.mxu0 0
        %1354 = vmatpush1.bf16.msra.mxu0 0
        %1355 = vmatprep.subr.bf16.mxu0 0
        %1356 = vmatpush1.bf16.msra.mxu0 0
        %1357 = vmatprep.subr.bf16.mxu0 0
        %1358 = vmatpush1.bf16.msra.mxu0 0
        %1359 = vmatprep.subr.bf16.mxu0 0
        %1360 = vmatpush1.bf16.msra.mxu0 0
        %1361 = vmatprep.subr.bf16.mxu0 0
        %1362 = vmatpush1.bf16.msra.mxu0 0
        %1363 = vmatprep.subr.bf16.mxu0 0
        %1364 = vmatpush1.bf16.msra.mxu0 0
        %1365 = vmatprep.subr.bf16.mxu0 0
        %1366 = vmatpush1.bf16.msra.mxu0 0
        %1367 = vmatprep.subr.bf16.mxu0 0
        %1368 = vmatpush1.bf16.msra.mxu0 0
        %1369 = vmatprep.subr.bf16.mxu0 0
        %1370 = vmatpush1.bf16.msra.mxu0 0
        %1371 = vmatprep.mubr.bf16.mxu0 0
        %1372 = vmatmul.mubr.bf16.gmra.mrb[0].mxu0 %v1331
        %v1373 = vpop.f32.mrb[0].mxu0
        %v1374 = vadd.f32 0.0, %v1373
        %v1375 = vpop.f32.mrb[0].mxu0
        %v1376 = vpop.f32.mrb[0].mxu0
        %v1377 = vadd.f32 0.0, %v1376
        %v1378 = vpop.f32.mrb[0].mxu0
        %1379 = vmatprep.mubr.bf16.mxu0 0
        %1380 = vmatmul.mubr.bf16.gmra.mrb[0].mxu0 %v1334
        %v1381 = vpop.f32.mrb[0].mxu0
        %v1382 = vadd.f32 0.0, %v1381
        %v1383 = vpop.f32.mrb[0].mxu0
        %v1384 = vpop.f32.mrb[0].mxu0
        %v1385 = vpop.f32.mrb[0].mxu0
        %1386 = vdwg.mxu0
        %1390 = vrot.lane.b32.xlu0 %v1038, 8
        %v1391 = vpop.permute.xlu0 %1390
        %1392 = vrot.lane.b32.xlu0 %v1041, 8
        %v1393 = vpop.permute.xlu0 %1392
        %1394 = vrot.lane.b32.xlu0 %v1046, 8
        %v1395 = vpop.permute.xlu0 %1394
        %1402 = vrot.lane.b32.xlu0 %v1206, 16
        %v1403 = vpop.permute.xlu0 %1402
        %1404 = vrot.lane.b32.xlu0 %v1209, 16
        %v1405 = vpop.permute.xlu0 %1404
        %1406 = vrot.lane.b32.xlu0 %v1214, 16
        %v1407 = vpop.permute.xlu0 %1406
        %1414 = vrot.lane.b32.xlu0 %v1374, 24
        %v1415 = vpop.permute.xlu0 %1414
        %1416 = vrot.lane.b32.xlu0 %v1377, 24
        %v1417 = vpop.permute.xlu0 %1416
        %1418 = vrot.lane.b32.xlu0 %v1382, 24
        %v1419 = vpop.permute.xlu0 %1418
        %v1423 = vsel %vm717, %v870, %v1391
        %v1424 = vsel %vm717, %v873, %v1393
        %v1425 = vsel %vm717, %v878, %v1395
        %vm1426 = vcmask 130048
        %v1427 = vsel %vm1426, %v1423, %v1403
        %v1428 = vsel %vm1426, %v1424, %v1405
        %v1429 = vsel %vm1426, %v1425, %v1407
        %vm1430 = vcmask 195584
        %v1431 = vsel %vm1430, %v1427, %v1415
        %v1432 = vsel %vm1430, %v1428, %v1417
        %v1433 = vsel %vm1430, %v1429, %v1419
        %v1434 = vpack.c.bf16 %v1432, %v1431
        %v1435 = vpack.c.bf16 %v1433, %v1433
        %v1436 = vld [vmem:[#allocation8] sm:$0xf]
        %v1437 = vld [vmem:[#allocation8 + $0x4] sm:$0xf]
        %v1438 = vld [vmem:[#allocation8 + $0x8] sm:$0xf]
        %v1439 = vld [vmem:[#allocation8 + $0xc] sm:$0xf]
        %v1440 = vld [vmem:[#allocation10] sm:$0x1]
        %v1441 = vunpack.c.l.bf16 %v1440
        %v1442 = vlaneseq
        %v1443 = vshrl.u32 %v1442, 7
        %v1444 = vsub.s32 0, %v1443
        %v1445 = vrot.slane %v1441, %v1444
        %v1450 = vunpack.c.l.b16 %v1436
        %v1451 = vunpack.c.l.b16 %v1437
        %v1452 = vunpack.c.l.b16 %v1438
        %v1453 = vunpack.c.l.b16 %v1439
        %v1454 = vpack.c.b16 %v1451, %v1450
        %v1455 = vpack.c.b16 %v1453, %v1452
        %v1459 = vsel %vm654, %v1434, 0
        %v1462 = vsel %vm654, %v1435, 0
        %1464 = vmatprep.subr.bf16.mxu0 0
        %1465 = vmatpush1.bf16.msra.mxu0 %v1454
        %1466 = vmatprep.subr.bf16.mxu0 0
        %1467 = vmatpush1.bf16.msra.mxu0 %v1455
        %1468 = vmatprep.subr.bf16.mxu0 0
        %1469 = vmatpush1.bf16.msra.mxu0 0
        %1470 = vmatprep.subr.bf16.mxu0 0
        %1471 = vmatpush1.bf16.msra.mxu0 0
        %1472 = vmatprep.subr.bf16.mxu0 0
        %1473 = vmatpush1.bf16.msra.mxu0 0
        %1474 = vmatprep.subr.bf16.mxu0 0
        %1475 = vmatpush1.bf16.msra.mxu0 0
        %1476 = vmatprep.subr.bf16.mxu0 0
        %1477 = vmatpush1.bf16.msra.mxu0 0
        %1478 = vmatprep.subr.bf16.mxu0 0
        %1479 = vmatpush1.bf16.msra.mxu0 0
        %1480 = vmatprep.subr.bf16.mxu0 0
        %1481 = vmatpush1.bf16.msra.mxu0 0
        %1482 = vmatprep.subr.bf16.mxu0 0
        %1483 = vmatpush1.bf16.msra.mxu0 0
        %1484 = vmatprep.subr.bf16.mxu0 0
        %1485 = vmatpush1.bf16.msra.mxu0 0
        %1486 = vmatprep.subr.bf16.mxu0 0
        %1487 = vmatpush1.bf16.msra.mxu0 0
        %1488 = vmatprep.subr.bf16.mxu0 0
        %1489 = vmatpush1.bf16.msra.mxu0 0
        %1490 = vmatprep.subr.bf16.mxu0 0
        %1491 = vmatpush1.bf16.msra.mxu0 0
        %1492 = vmatprep.subr.bf16.mxu0 0
        %1493 = vmatpush1.bf16.msra.mxu0 0
        %1494 = vmatprep.subr.bf16.mxu0 0
        %1495 = vmatpush1.bf16.msra.mxu0 0
        %1496 = vmatprep.mubr.bf16.mxu0 0
        %1497 = vmatmul.mubr.bf16.gmra.mrb[0].mxu0 %v1459
        %v1498 = vpop.f32.mrb[0].mxu0
        %v1499 = vadd.f32 %v1445, %v1498
        %v1500 = vpop.f32.mrb[0].mxu0
        %v1501 = vpop.f32.mrb[0].mxu0
        %v1502 = vadd.f32 %v1445, %v1501
        %v1503 = vpop.f32.mrb[0].mxu0
        %1504 = vmatprep.mubr.bf16.mxu0 0
        %1505 = vmatmul.mubr.bf16.gmra.mrb[0].mxu0 %v1462
        %v1506 = vpop.f32.mrb[0].mxu0
        %v1507 = vadd.f32 %v1445, %v1506
        %v1508 = vpop.f32.mrb[0].mxu0
        %v1509 = vpop.f32.mrb[0].mxu0
        %v1510 = vpop.f32.mrb[0].mxu0
        %1511 = vdwg.mxu0
        %v1512 = vadd.f32 %v621, %v1499
        %v1513 = vadd.f32 %v622, %v1502
        %v1514 = vadd.f32 %v623, %v1507
        %v1515 = vld [vmem:[#allocation11] sm:$0x1]
        %v1516 = vunpack.c.l.bf16 %v1515
        %v1517 = vld [vmem:[#allocation13] sm:$0x1]
        %v1518 = vunpack.c.l.bf16 %v1517
        %v1519 = vsel %vm654, %v1512, 0.0
        %1520 = vadd.xlane.f32.xlu0 %v1519
        %v1521 = vpop.xlane.xlu0 %1520
        %v1522 = vsel %vm654, %v1513, 0.0
        %1523 = vadd.xlane.f32.xlu0 %v1522
        %v1524 = vpop.xlane.xlu0 %1523
        %vm1525 = vcmask 253952
        %v1526 = vsel %vm1525, %v1514, 0.0
        %1527 = vadd.xlane.f32.xlu0 %v1526
        %v1528 = vpop.xlane.xlu0 %1527
        %v1529 = vrcp.pop 32.0
        %v1530 = vmul.f32 %v1521, %v1529
        %v1531 = vmul.f32 %v1524, %v1529
        %v1532 = vmul.f32 %v1528, %v1529
        %v1533 = vsub.f32 %v1512, %v1530
        %v1534 = vsub.f32 %v1513, %v1531
        %v1535 = vsub.f32 %v1514, %v1532
        %v1536 = vmul.f32 %v1533, %v1533
        %v1537 = vmul.f32 %v1534, %v1534
        %v1538 = vmul.f32 %v1535, %v1535
        %v1539 = vsel %vm654, %v1536, 0.0
        %1540 = vadd.xlane.f32.xlu0 %v1539
        %v1541 = vpop.xlane.xlu0 %1540
        %v1542 = vsel %vm654, %v1537, 0.0
        %1543 = vadd.xlane.f32.xlu0 %v1542
        %v1544 = vpop.xlane.xlu0 %1543
        %v1545 = vsel %vm1525, %v1538, 0.0
        %1546 = vadd.xlane.f32.xlu0 %v1545
        %v1547 = vpop.xlane.xlu0 %1546
        %v1548 = vmul.f32 %v1541, %v1529
        %v1549 = vmul.f32 %v1544, %v1529
        %v1550 = vmul.f32 %v1547, %v1529
        %v1551 = vadd.f32 %v1548, 1e-05
        %v1552 = vadd.f32 %v1549, 1e-05
        %v1553 = vadd.f32 %v1550, 1e-05
        %v1554 = vrsqrt.pop %v1551
        %v1555 = vrsqrt.pop %v1552
        %v1556 = vrsqrt.pop %v1553
        %v1557 = vmul.f32 %v1533, %v1554
        %v1558 = vmul.f32 %v1534, %v1555
        %v1559 = vmul.f32 %v1535, %v1556
        %v1560 = vlaneseq
        %v1561 = vshrl.u32 %v1560, 7
        %v1562 = vsub.s32 0, %v1561
        %v1563 = vrot.slane %v1516, %v1562
        %v1564 = vmul.f32 %v1557, %v1563
        %v1565 = vmul.f32 %v1558, %v1563
        %v1566 = vmul.f32 %v1559, %v1563
        %v1567 = vlaneseq
        %v1568 = vshrl.u32 %v1567, 7
        %v1569 = vsub.s32 0, %v1568
        %v1570 = vrot.slane %v1518, %v1569
        %v1571 = vadd.f32 %v1564, %v1570
        %v1572 = vadd.f32 %v1565, %v1570
        %v1573 = vadd.f32 %v1566, %v1570
        %v1574 = vpack.c.bf16 %v1572, %v1571
        %v1575 = vpack.c.bf16 %v1573, %v1573
        %v1576 = vld [vmem:[#allocation14] sm:$0xf]
        %v1577 = vld [vmem:[#allocation14 + $0x4] sm:$0xf]
        %v1578 = vld [vmem:[#allocation14 + $0x8] sm:$0xf]
        %v1579 = vld [vmem:[#allocation14 + $0xc] sm:$0xf]
        %v1580 = vld [vmem:[#allocation16] sm:$0x1]
        %v1581 = vunpack.c.l.bf16 %v1580
        %v1582 = vlaneseq
        %v1583 = vshrl.u32 %v1582, 7
        %v1584 = vsub.s32 0, %v1583
        %v1585 = vrot.slane %v1581, %v1584
        %v1590 = vunpack.c.l.b16 %v1576
        %v1591 = vunpack.c.l.b16 %v1577
        %v1592 = vunpack.c.l.b16 %v1578
        %v1593 = vunpack.c.l.b16 %v1579
        %v1594 = vpack.c.b16 %v1591, %v1590
        %v1595 = vpack.c.b16 %v1593, %v1592
        %v1599 = vsel %vm654, %v1574, 0
        %v1602 = vsel %vm654, %v1575, 0
        %1604 = vmatprep.subr.bf16.mxu0 0
        %1605 = vmatpush1.bf16.msra.mxu0 %v1594
        %1606 = vmatprep.subr.bf16.mxu0 0
        %1607 = vmatpush1.bf16.msra.mxu0 %v1595
        %1608 = vmatprep.subr.bf16.mxu0 0
        %1609 = vmatpush1.bf16.msra.mxu0 0
        %1610 = vmatprep.subr.bf16.mxu0 0
        %1611 = vmatpush1.bf16.msra.mxu0 0
        %1612 = vmatprep.subr.bf16.mxu0 0
        %1613 = vmatpush1.bf16.msra.mxu0 0
        %1614 = vmatprep.subr.bf16.mxu0 0
        %1615 = vmatpush1.bf16.msra.mxu0 0
        %1616 = vmatprep.subr.bf16.mxu0 0
        %1617 = vmatpush1.bf16.msra.mxu0 0
        %1618 = vmatprep.subr.bf16.mxu0 0
        %1619 = vmatpush1.bf16.msra.mxu0 0
        %1620 = vmatprep.subr.bf16.mxu0 0
        %1621 = vmatpush1.bf16.msra.mxu0 0
        %1622 = vmatprep.subr.bf16.mxu0 0
        %1623 = vmatpush1.bf16.msra.mxu0 0
        %1624 = vmatprep.subr.bf16.mxu0 0
        %1625 = vmatpush1.bf16.msra.mxu0 0
        %1626 = vmatprep.subr.bf16.mxu0 0
        %1627 = vmatpush1.bf16.msra.mxu0 0
        %1628 = vmatprep.subr.bf16.mxu0 0
        %1629 = vmatpush1.bf16.msra.mxu0 0
        %1630 = vmatprep.subr.bf16.mxu0 0
        %1631 = vmatpush1.bf16.msra.mxu0 0
        %1632 = vmatprep.subr.bf16.mxu0 0
        %1633 = vmatpush1.bf16.msra.mxu0 0
        %1634 = vmatprep.subr.bf16.mxu0 0
        %1635 = vmatpush1.bf16.msra.mxu0 0
        %1636 = vmatprep.mubr.bf16.mxu0 0
        %1637 = vmatmul.mubr.bf16.gmra.mrb[0].mxu0 %v1599
        %v1638 = vpop.f32.mrb[0].mxu0
        %v1639 = vadd.f32 %v1585, %v1638
        %v1640 = vpop.f32.mrb[0].mxu0
        %v1641 = vpop.f32.mrb[0].mxu0
        %v1642 = vadd.f32 %v1585, %v1641
        %v1643 = vpop.f32.mrb[0].mxu0
        %1644 = vmatprep.mubr.bf16.mxu0 0
        %1645 = vmatmul.mubr.bf16.gmra.mrb[0].mxu0 %v1602
        %v1646 = vpop.f32.mrb[0].mxu0
        %v1647 = vadd.f32 %v1585, %v1646
        %v1648 = vpop.f32.mrb[0].mxu0
        %v1649 = vpop.f32.mrb[0].mxu0
        %v1650 = vpop.f32.mrb[0].mxu0
        %1651 = vdwg.mxu0
        %v1652 = vmax.f32 %v1639, 0.0
        %v1653 = vmax.f32 %v1642, 0.0
        %v1654 = vmax.f32 %v1647, 0.0
        %v1655 = vpack.c.bf16 %v1653, %v1652
        %v1656 = vpack.c.bf16 %v1654, %v1654
        %v1657 = vld [vmem:[#allocation17] sm:$0xf]
        %v1658 = vld [vmem:[#allocation17 + $0x4] sm:$0xf]
        %v1659 = vld [vmem:[#allocation17 + $0x8] sm:$0xf]
        %v1660 = vld [vmem:[#allocation17 + $0xc] sm:$0xf]
        %v1661 = vld [vmem:[#allocation17 + $0x10] sm:$0xf]
        %v1662 = vld [vmem:[#allocation17 + $0x14] sm:$0xf]
        %v1663 = vld [vmem:[#allocation17 + $0x18] sm:$0xf]
        %v1664 = vld [vmem:[#allocation17 + $0x1c] sm:$0xf]
        %v1665 = vld [vmem:[#allocation19] sm:$0x1]
        %v1666 = vunpack.c.l.bf16 %v1665
        %v1667 = vlaneseq
        %v1668 = vshrl.u32 %v1667, 7
        %v1669 = vsub.s32 0, %v1668
        %v1670 = vrot.slane %v1666, %v1669
        %v1679 = vunpack.c.l.b16 %v1657
        %v1680 = vunpack.c.l.b16 %v1658
        %v1681 = vunpack.c.l.b16 %v1659
        %v1682 = vunpack.c.l.b16 %v1660
        %v1683 = vunpack.c.l.b16 %v1661
        %v1684 = vunpack.c.l.b16 %v1662
        %v1685 = vunpack.c.l.b16 %v1663
        %v1686 = vunpack.c.l.b16 %v1664
        %v1687 = vpack.c.b16 %v1680, %v1679
        %v1688 = vpack.c.b16 %v1682, %v1681
        %v1689 = vpack.c.b16 %v1684, %v1683
        %v1690 = vpack.c.b16 %v1686, %v1685
        %vm1695 = vcmask 523264
        %v1697 = vsel %vm1695, %v1655, 0
        %v1700 = vsel %vm1695, %v1656, 0
        %1702 = vmatprep.subr.bf16.mxu0 0
        %1703 = vmatpush1.bf16.msra.mxu0 %v1687
        %1704 = vmatprep.subr.bf16.mxu0 0
        %1705 = vmatpush1.bf16.msra.mxu0 %v1688
        %1706 = vmatprep.subr.bf16.mxu0 0
        %1707 = vmatpush1.bf16.msra.mxu0 %v1689
        %1708 = vmatprep.subr.bf16.mxu0 0
        %1709 = vmatpush1.bf16.msra.mxu0 %v1690
        %1710 = vmatprep.subr.bf16.mxu0 0
        %1711 = vmatpush1.bf16.msra.mxu0 0
        %1712 = vmatprep.subr.bf16.mxu0 0
        %1713 = vmatpush1.bf16.msra.mxu0 0
        %1714 = vmatprep.subr.bf16.mxu0 0
        %1715 = vmatpush1.bf16.msra.mxu0 0
        %1716 = vmatprep.subr.bf16.mxu0 0
        %1717 = vmatpush1.bf16.msra.mxu0 0
        %1718 = vmatprep.subr.bf16.mxu0 0
        %1719 = vmatpush1.bf16.msra.mxu0 0
        %1720 = vmatprep.subr.bf16.mxu0 0
        %1721 = vmatpush1.bf16.msra.mxu0 0
        %1722 = vmatprep.subr.bf16.mxu0 0
        %1723 = vmatpush1.bf16.msra.mxu0 0
        %1724 = vmatprep.subr.bf16.mxu0 0
        %1725 = vmatpush1.bf16.msra.mxu0 0
        %1726 = vmatprep.subr.bf16.mxu0 0
        %1727 = vmatpush1.bf16.msra.mxu0 0
        %1728 = vmatprep.subr.bf16.mxu0 0
        %1729 = vmatpush1.bf16.msra.mxu0 0
        %1730 = vmatprep.subr.bf16.mxu0 0
        %1731 = vmatpush1.bf16.msra.mxu0 0
        %1732 = vmatprep.subr.bf16.mxu0 0
        %1733 = vmatpush1.bf16.msra.mxu0 0
        %1734 = vmatprep.mubr.bf16.mxu0 0
        %1735 = vmatmul.mubr.bf16.gmra.mrb[0].mxu0 %v1697
        %v1736 = vpop.f32.mrb[0].mxu0
        %v1737 = vadd.f32 %v1670, %v1736
        %v1738 = vpop.f32.mrb[0].mxu0
        %v1739 = vpop.f32.mrb[0].mxu0
        %v1740 = vadd.f32 %v1670, %v1739
        %v1741 = vpop.f32.mrb[0].mxu0
        %1742 = vmatprep.mubr.bf16.mxu0 0
        %1743 = vmatmul.mubr.bf16.gmra.mrb[0].mxu0 %v1700
        %v1744 = vpop.f32.mrb[0].mxu0
        %v1745 = vadd.f32 %v1670, %v1744
        %v1746 = vpop.f32.mrb[0].mxu0
        %v1747 = vpop.f32.mrb[0].mxu0
        %v1748 = vpop.f32.mrb[0].mxu0
        %1749 = vdwg.mxu0
        %v1750 = vadd.f32 %v1737, %v1571
        %v1751 = vadd.f32 %v1740, %v1572
        %v1752 = vadd.f32 %v1745, %v1573
        %v1753 = vld [vmem:[#allocation20] sm:$0x1]
        %v1754 = vunpack.c.l.bf16 %v1753
        %v1755 = vld [vmem:[#allocation22] sm:$0x1]
        %v1756 = vunpack.c.l.bf16 %v1755
        %v1757 = vsel %vm654, %v1750, 0.0
        %1758 = vadd.xlane.f32.xlu0 %v1757
        %v1759 = vpop.xlane.xlu0 %1758
        %v1760 = vsel %vm654, %v1751, 0.0
        %1761 = vadd.xlane.f32.xlu0 %v1760
        %v1762 = vpop.xlane.xlu0 %1761
        %v1763 = vsel %vm1525, %v1752, 0.0
        %1764 = vadd.xlane.f32.xlu0 %v1763
        %v1765 = vpop.xlane.xlu0 %1764
        %v1766 = vmul.f32 %v1759, %v1529
        %v1767 = vmul.f32 %v1762, %v1529
        %v1768 = vmul.f32 %v1765, %v1529
        %v1769 = vsub.f32 %v1750, %v1766
        %v1770 = vsub.f32 %v1751, %v1767
        %v1771 = vsub.f32 %v1752, %v1768
        %v1772 = vmul.f32 %v1769, %v1769
        %v1773 = vmul.f32 %v1770, %v1770
        %v1774 = vmul.f32 %v1771, %v1771
        %v1775 = vsel %vm654, %v1772, 0.0
        %1776 = vadd.xlane.f32.xlu0 %v1775
        %v1777 = vpop.xlane.xlu0 %1776
        %v1778 = vsel %vm654, %v1773, 0.0
        %1779 = vadd.xlane.f32.xlu0 %v1778
        %v1780 = vpop.xlane.xlu0 %1779
        %v1781 = vsel %vm1525, %v1774, 0.0
        %1782 = vadd.xlane.f32.xlu0 %v1781
        %v1783 = vpop.xlane.xlu0 %1782
        %v1784 = vmul.f32 %v1777, %v1529
        %v1785 = vmul.f32 %v1780, %v1529
        %v1786 = vmul.f32 %v1783, %v1529
        %v1787 = vadd.f32 %v1784, 1e-05
        %v1788 = vadd.f32 %v1785, 1e-05
        %v1789 = vadd.f32 %v1786, 1e-05
        %v1790 = vrsqrt.pop %v1787
        %v1791 = vrsqrt.pop %v1788
        %v1792 = vrsqrt.pop %v1789
        %v1793 = vmul.f32 %v1769, %v1790
        %v1794 = vmul.f32 %v1770, %v1791
        %v1795 = vmul.f32 %v1771, %v1792
        %v1796 = vlaneseq
        %v1797 = vshrl.u32 %v1796, 7
        %v1798 = vsub.s32 0, %v1797
        %v1799 = vrot.slane %v1754, %v1798
        %v1800 = vmul.f32 %v1793, %v1799
        %v1801 = vmul.f32 %v1794, %v1799
        %v1802 = vmul.f32 %v1795, %v1799
        %v1803 = vlaneseq
        %v1804 = vshrl.u32 %v1803, 7
        %v1805 = vsub.s32 0, %v1804
        %v1806 = vrot.slane %v1756, %v1805
        %v1807 = vadd.f32 %v1800, %v1806
        %v1808 = vadd.f32 %v1801, %v1806
        %v1809 = vadd.f32 %v1802, %v1806
        %v1810 = vadd.f32 %v1807, %v621
        %v1811 = vadd.f32 %v1808, %v622
        %v1812 = vadd.f32 %v1809, %v623
        %v1813 = vpack.c.bf16 %v1811, %v1810
        %v1814 = vpack.c.bf16 %v1812, %v1812
        %v1817 = vunpack.c.l.b16 %v1813
        %v1818 = vunpack.c.h.b16 %v1813
        %v1819 = vunpack.c.l.b16 %v1814
        %v1820 = vpack.c.b16 %v1817, %v1817
        %v1821 = vpack.c.b16 %v1818, %v1818
        %v1822 = vpack.c.b16 %v1819, %v1819
        %vm1826 = vcmask 257024
        %1827 = vst.msk [vmem:[%s616] sm:$0xf] %vm1826, %v1820
        %1828 = vst.msk [vmem:[%s616 + $0x4] sm:$0xf] %vm1826, %v1821
        %vm1829 = vcmask 253952
        %vm1830 = vsmask.f32 256
        %vm1831 = vmand %vm1829, %vm1830
        %v1832 = vld [vmem:[%s616 + $0x8] sm:$0x1]
        %v1833 = vsel %vm1831, %v1822, %v1832
        %1834 = vst [vmem:[%s616 + $0x8] sm:$0x1] %v1833
        %s1835 = sand.u32 %s322, 1
        %s1836 = scalar_lea.sflag [#allocation4], %s1835
        %s1837 = sand.u32 %s322, 1
        %s1838 = smul.addr %s1837, 12
        %s1839 = scalar_lea.vmem [#allocation23], %s1838
        // Predicated region
        $region125: #{vit_encoder_forward.5} parent=71 // pred_check
          %p1840 = pneg %p332
        $region126: #{vit_encoder_forward.5} parent=71 // pred_check_branch
          %1842 = sbr.rel (%p1840) target = $region128
        $region127: #{vit_encoder_forward.5} parent=71 // pred_region
          %s1844 = ssub.s32 192, 192
          %1845 = vsyncadd %s1836, %s1844
          %s1846 = smul.addr %s36, 3
          %s1847 = smul.addr %s1846, 64
          %s1848 = scalar_lea.hbm %s13, %s1847
          %s1849 = sshll.u32 %s1839, 4
          %s1850 = int_to_ptr.vmem [resolvable:$true] %s1849
          %1855 = dma.vmem_to_hbm [thread:$0]  %s1850, 192, %s1848, %s1836, 64, 64, 4
        $region128: #{vit_encoder_forward.5} parent=71 // pred_fallthru
          _
      $region72: #{vit_encoder_forward.5} parent=5 // pred_fallthru
        _
      %p1856 = scmp.le.s32.totalorder 2, %s31
      // Predicated region
      $region129: #{vit_encoder_forward.5} parent=5 // pred_check
        %p1857 = pneg %p1856
      $region130: #{vit_encoder_forward.5} parent=5 // pred_check_branch
        %1859 = sbr.rel (%p1857) target = $region132
      $region131: #{vit_encoder_forward.5} parent=5 // pred_region
        %s1860 = ssub.s32 %s31, 2
        // Predicated region
        $region133: #{vit_encoder_forward.5} parent=131 // pred_check
          %p1861 = pneg %p338
        $region134: #{vit_encoder_forward.5} parent=131 // pred_check_branch
          %1863 = sbr.rel (%p1861) target = $region136
        $region135: #{vit_encoder_forward.5} parent=131 // pred_region
          %s1864 = sand.u32 %s323, 1
          %s1865 = scalar_lea.sflag [#allocation4], %s1864
          %s1866 = sand.u32 %s323, 1
          %s1867 = smul.addr %s1866, 12
          %s1868 = scalar_lea.vmem [#allocation23], %s1867
          %1869 = dma.done %s1865, 192
        $region136: #{vit_encoder_forward.5} parent=131 // pred_fallthru
          _
      $region132: #{vit_encoder_forward.5} parent=5 // pred_fallthru
        _
    $region6: #{vit_encoder_forward.5} parent=1 // loop_footer
      %s35 = sadd.s32 1, %s31
    $region7: #{vit_encoder_forward.5} parent=1 // loop_footer_branch
      %30 = sbr.rel target = $region3
    $region8: #{vit_encoder_forward.5} parent=1 // loop_exit
      _
    %1870 = vsyncpa [#allocation3], 1
    %s1871 = scalar_lea.sflag [#allocation3], 1
    %1872 = vsyncpa %s1871, 1
    %1873 = vsyncpa [#allocation6], 1
    %1874 = vsyncpa [#allocation9], 1
    %1875 = vsyncpa [#allocation12], 1
    %1876 = vsyncpa [#allocation15], 1
    %1877 = vsyncpa [#allocation18], 1
    %1878 = vsyncpa [#allocation21], 1
    %1879 = vsyncpa [#allocation4], 1
    %s1880 = scalar_lea.sflag [#allocation4], 1
    %1881 = vsyncpa %s1880, 1

</llo_original>
